<compile_context>
chip_gen: v7x
topology: tpu7x:2x2x1
jax: 0.10.0
libtpu: 0.0.40
codegen_flags: <defaults>
</compile_context>

<pallas_src>
import functools

import jax
import jax.numpy as jnp
from jax.experimental import pallas as pl
from jax.experimental.pallas import tpu as pltpu


def _sigmoid(x):
    # tanh form of the logistic: EUP tanh + cheap VALU mul/add.
    # Avoids the multi-op f32 divide of 1/(1+exp(-x)) and is numerically safe.
    return 0.5 * jnp.tanh(0.5 * x) + 0.5


def jr_inv_lstm_kernel(
    x_ref,      # (T*B, D)   time-major flattened input (row = t*B + b)
    wih1_ref,   # (D, 4H)
    whh1_ref,   # (H, 4H)
    b1_ref,     # (1, 4H)    b_ih + b_hh, layer 1
    wih2_ref,   # (H, 4H)
    whh2_ref,   # (H, 4H)
    b2_ref,     # (1, 4H)    b_ih + b_hh, layer 2
    wfc_ref,    # (H, P)
    bfc_ref,    # (1, P)
    out_ref,    # (B, P)
    *,
    seq_len,
    batch,
):
    T, B = seq_len, batch
    H = whh1_ref.shape[0]
    f32 = jnp.float32

    whh1 = whh1_ref[...]
    whh2 = whh2_ref[...]

    def lstm_cell(gates, c):
        # gates: (B, 4H) pre-activation, PyTorch order [i | f | g | o].
        # Activations at full 128-lane gate width (EUP), then static lane
        # slices for the cell/hidden update (VALU work only on small tiles).
        sg = _sigmoid(gates)
        i_g = sg[:, 0 * H:1 * H]
        f_g = sg[:, 1 * H:2 * H]
        o_g = sg[:, 3 * H:4 * H]
        g_g = jnp.tanh(gates[:, 2 * H:3 * H])
        c_new = f_g * c + i_g * g_g
        h_new = o_g * jnp.tanh(c_new)
        return h_new, c_new

    # ---- Layer 1: hoisted input projection (one batched MXU matmul) --------
    xw1 = (
        jnp.dot(x_ref[...], wih1_ref[...], preferred_element_type=f32)
        + b1_ref[...]
    )  # (T*B, 4H)

    # ---- Layer 1: recurrence (only h @ W_hh on the serial chain) -----------
    h1 = jnp.zeros((B, H), f32)
    c1 = jnp.zeros((B, H), f32)
    h1_steps = []
    for t in range(T):  # static T -> fully unrolled, scheduler sees all steps
        gates = xw1[t * B:(t + 1) * B, :] + jnp.dot(
            h1, whh1, preferred_element_type=f32)
        h1, c1 = lstm_cell(gates, c1)
        h1_steps.append(h1)

    # ---- Layer 2: hoisted input projection over the whole h1 sequence ------
    # (Inter-layer dropout is identity in eval mode.)
    h1_all = jnp.concatenate(h1_steps, axis=0)           # (T*B, H), time-major
    xw2 = (
        jnp.dot(h1_all, wih2_ref[...], preferred_element_type=f32)
        + b2_ref[...]
    )  # (T*B, 4H)

    # ---- Layer 2: recurrence ------------------------------------------------
    h2 = jnp.zeros((B, H), f32)
    c2 = jnp.zeros((B, H), f32)
    for t in range(T):
        gates = xw2[t * B:(t + 1) * B, :] + jnp.dot(
            h2, whh2, preferred_element_type=f32)
        h2, c2 = lstm_cell(gates, c2)

    # ---- Final FC on the last timestep's layer-2 hidden state --------------
    out_ref[...] = (
        jnp.dot(h2, wfc_ref[...], preferred_element_type=f32) + bfc_ref[...]
    )


def jr_inv_lstm_forward(x, params):
    B, T, D = x.shape
    H = params["whh1_t"].shape[0]
    P = params["wfc_t"].shape[1]

    # Layout plumbing only (wrapper-side, ~256 B): time-major flattened rows
    # (t*B + b) so every per-timestep access in the kernel is a static slice.
    x_tb = jnp.transpose(x, (1, 0, 2)).reshape(T * B, D)

    kernel = functools.partial(jr_inv_lstm_kernel, seq_len=T, batch=B)
    vmem = pl.BlockSpec(memory_space=pltpu.MemorySpace.VMEM)

    return pl.pallas_call(
        kernel,
        out_shape=jax.ShapeDtypeStruct((B, P), jnp.float32),
        in_specs=[vmem] * 9,
        out_specs=vmem,
    )(
        x_tb,
        params["wih1_t"], params["whh1_t"], params["b1"],
        params["wih2_t"], params["whh2_t"], params["b2"],
        params["wfc_t"], params["bfc"],
    )


def init_params(key, input_dim, hidden_size, num_params):
    """Deterministic init mimicking PyTorch's uniform(-1/sqrt(H), 1/sqrt(H))."""
    H = hidden_size
    k = 1.0 / jnp.sqrt(jnp.float32(H))
    keys = jax.random.split(key, 12)
    u = lambda kk, shape: jax.random.uniform(kk, shape, jnp.float32, -k, k)

    # Layer 1
    w_ih1 = u(keys[0], (4 * H, input_dim))
    w_hh1 = u(keys[1], (4 * H, H))
    b_ih1 = u(keys[2], (4 * H,))
    b_hh1 = u(keys[3], (4 * H,))
    # Layer 2
    w_ih2 = u(keys[4], (4 * H, H))
    w_hh2 = u(keys[5], (4 * H, H))
    b_ih2 = u(keys[6], (4 * H,))
    b_hh2 = u(keys[7], (4 * H,))
    # FC (PyTorch Linear: uniform(-1/sqrt(in_features), 1/sqrt(in_features)))
    w_fc = jax.random.uniform(keys[8], (num_params, H), jnp.float32, -k, k)
    b_fc = jax.random.uniform(keys[9], (num_params,), jnp.float32, -k, k)

    return {
        "wih1_t": w_ih1.T, "whh1_t": w_hh1.T, "b1": (b_ih1 + b_hh1)[None, :],
        "wih2_t": w_ih2.T, "whh2_t": w_hh2.T, "b2": (b_ih2 + b_hh2)[None, :],
        "wfc_t": w_fc.T, "bfc": b_fc[None, :],
    }


def reference_forward(x, params):
    """Pure-JAX reference of the same 2-layer LSTM + FC (eval mode)."""
    B, T, D = x.shape
    H = params["whh1_t"].shape[0]

    def cell(inp, h, c, wih_t, whh_t, b):
        gates = inp @ wih_t + h @ whh_t + b
        i_g = jax.nn.sigmoid(gates[:, 0 * H:1 * H])
        f_g = jax.nn.sigmoid(gates[:, 1 * H:2 * H])
        g_g = jnp.tanh(gates[:, 2 * H:3 * H])
        o_g = jax.nn.sigmoid(gates[:, 3 * H:4 * H])
        c_new = f_g * c + i_g * g_g
        h_new = o_g * jnp.tanh(c_new)
        return h_new, c_new

    h1 = c1 = h2 = c2 = jnp.zeros((B, H), jnp.float32)
    for t in range(T):
        x_t = x[:, t, :]
        h1, c1 = cell(x_t, h1, c1, params["wih1_t"], params["whh1_t"], params["b1"])
        h2, c2 = cell(h1, h2, c2, params["wih2_t"], params["whh2_t"], params["b2"])
    return h2 @ params["wfc_t"] + params["bfc"]


if __name__ == "__main__":
    # Small shapes consistent with the module's forward:
    #   batch=2, seq_length=8, input_dim=4, hidden_size=32, num_params=4
    B, T, D, H, P = 2, 8, 4, 32, 4

    key = jax.random.PRNGKey(0)
    kx, kp = jax.random.split(key)
    x = jax.random.normal(kx, (B, T, D), jnp.float32)
    params = init_params(kp, input_dim=D, hidden_size=H, num_params=P)

    fwd = jax.jit(jr_inv_lstm_forward)
    out = jax.block_until_ready(fwd(x, params))

    ref = reference_forward(x, params)
    assert out.shape == (B, P)
    assert jnp.allclose(out, ref, atol=1e-4, rtol=1e-4), "mismatch vs JAX reference"

    print("KERNEL_OK")
</pallas_src>

<mosaic_0001>
module attributes {stable_mosaic.version = 11 : i64} {
  func.func @jr_inv_lstm_kernel(%arg0: memref<16x4xf32, #tpu.memory_space<vmem>>, %arg1: memref<4x128xf32, #tpu.memory_space<vmem>>, %arg2: memref<32x128xf32, #tpu.memory_space<vmem>>, %arg3: memref<1x128xf32, #tpu.memory_space<vmem>>, %arg4: memref<32x128xf32, #tpu.memory_space<vmem>>, %arg5: memref<32x128xf32, #tpu.memory_space<vmem>>, %arg6: memref<1x128xf32, #tpu.memory_space<vmem>>, %arg7: memref<32x4xf32, #tpu.memory_space<vmem>>, %arg8: memref<1x4xf32, #tpu.memory_space<vmem>>, %arg9: memref<2x4xf32, #tpu.memory_space<vmem>>) attributes {dimension_semantics = [], scalar_prefetch = 0 : i64, scratch_operands = 0 : i64, tpu.core_type = #tpu.core_type<tc>} {
    %c0 = arith.constant 0 : index
    %c0_0 = arith.constant 0 : index
    %0 = vector.load %arg2[%c0, %c0_0] : memref<32x128xf32, #tpu.memory_space<vmem>>, vector<32x128xf32>
    %c0_1 = arith.constant 0 : index
    %c0_2 = arith.constant 0 : index
    %1 = vector.load %arg5[%c0_1, %c0_2] : memref<32x128xf32, #tpu.memory_space<vmem>>, vector<32x128xf32>
    %c0_3 = arith.constant 0 : index
    %c0_4 = arith.constant 0 : index
    %2 = vector.load %arg0[%c0_3, %c0_4] : memref<16x4xf32, #tpu.memory_space<vmem>>, vector<16x4xf32>
    %c0_5 = arith.constant 0 : index
    %c0_6 = arith.constant 0 : index
    %3 = vector.load %arg1[%c0_5, %c0_6] : memref<4x128xf32, #tpu.memory_space<vmem>>, vector<4x128xf32>
    %cst = arith.constant dense<0.000000e+00> : vector<16x128xf32>
    %4 = tpu.matmul %2, %3, %cst {dimension_numbers = #tpu.dot_dimension_numbers<[1], [0], [0], [1], [0, 0, 1, 1], [], []>} : vector<16x4xf32>, vector<4x128xf32>, vector<16x128xf32> -> vector<16x128xf32>
    %c0_7 = arith.constant 0 : index
    %c0_8 = arith.constant 0 : index
    %5 = vector.load %arg3[%c0_7, %c0_8] : memref<1x128xf32, #tpu.memory_space<vmem>>, vector<1x128xf32>
    %6 = vector.broadcast %5 : vector<1x128xf32> to vector<16x128xf32>
    %7 = arith.addf %4, %6 : vector<16x128xf32>
    %cst_9 = arith.constant 0.000000e+00 : f32
    %8 = vector.broadcast %cst_9 : f32 to vector<2x32xf32>
    %cst_10 = arith.constant 0.000000e+00 : f32
    %9 = vector.broadcast %cst_10 : f32 to vector<2x32xf32>
    %10 = vector.extract_strided_slice %7 {offsets = [0, 0], sizes = [2, 128], strides = [1, 1]} : vector<16x128xf32> to vector<2x128xf32>
    %cst_11 = arith.constant dense<0.000000e+00> : vector<2x128xf32>
    %11 = tpu.matmul %8, %0, %cst_11 {dimension_numbers = #tpu.dot_dimension_numbers<[1], [0], [0], [1], [0, 0, 1, 1], [], []>} : vector<2x32xf32>, vector<32x128xf32>, vector<2x128xf32> -> vector<2x128xf32>
    %12 = arith.addf %10, %11 : vector<2x128xf32>
    %cst_12 = arith.constant 5.000000e-01 : f32
    %13 = vector.broadcast %cst_12 : f32 to vector<2x128xf32>
    %14 = arith.mulf %13, %12 : vector<2x128xf32>
    %15 = math.tanh %14 : vector<2x128xf32>
    %cst_13 = arith.constant 5.000000e-01 : f32
    %16 = vector.broadcast %cst_13 : f32 to vector<2x128xf32>
    %17 = arith.mulf %16, %15 : vector<2x128xf32>
    %cst_14 = arith.constant 5.000000e-01 : f32
    %18 = vector.broadcast %cst_14 : f32 to vector<2x128xf32>
    %19 = arith.addf %17, %18 : vector<2x128xf32>
    %20 = vector.extract_strided_slice %19 {offsets = [0, 0], sizes = [2, 32], strides = [1, 1]} : vector<2x128xf32> to vector<2x32xf32>
    %21 = vector.extract_strided_slice %19 {offsets = [0, 32], sizes = [2, 32], strides = [1, 1]} : vector<2x128xf32> to vector<2x32xf32>
    %22 = vector.extract_strided_slice %19 {offsets = [0, 96], sizes = [2, 32], strides = [1, 1]} : vector<2x128xf32> to vector<2x32xf32>
    %23 = vector.extract_strided_slice %12 {offsets = [0, 64], sizes = [2, 32], strides = [1, 1]} : vector<2x128xf32> to vector<2x32xf32>
    %24 = math.tanh %23 : vector<2x32xf32>
    %25 = arith.mulf %21, %9 : vector<2x32xf32>
    %26 = arith.mulf %20, %24 : vector<2x32xf32>
    %27 = arith.addf %25, %26 : vector<2x32xf32>
    %28 = math.tanh %27 : vector<2x32xf32>
    %29 = arith.mulf %22, %28 : vector<2x32xf32>
    %30 = vector.extract_strided_slice %7 {offsets = [2, 0], sizes = [2, 128], strides = [1, 1]} : vector<16x128xf32> to vector<2x128xf32>
    %cst_15 = arith.constant dense<0.000000e+00> : vector<2x128xf32>
    %31 = tpu.matmul %29, %0, %cst_15 {dimension_numbers = #tpu.dot_dimension_numbers<[1], [0], [0], [1], [0, 0, 1, 1], [], []>} : vector<2x32xf32>, vector<32x128xf32>, vector<2x128xf32> -> vector<2x128xf32>
    %32 = arith.addf %30, %31 : vector<2x128xf32>
    %cst_16 = arith.constant 5.000000e-01 : f32
    %33 = vector.broadcast %cst_16 : f32 to vector<2x128xf32>
    %34 = arith.mulf %33, %32 : vector<2x128xf32>
    %35 = math.tanh %34 : vector<2x128xf32>
    %cst_17 = arith.constant 5.000000e-01 : f32
    %36 = vector.broadcast %cst_17 : f32 to vector<2x128xf32>
    %37 = arith.mulf %36, %35 : vector<2x128xf32>
    %cst_18 = arith.constant 5.000000e-01 : f32
    %38 = vector.broadcast %cst_18 : f32 to vector<2x128xf32>
    %39 = arith.addf %37, %38 : vector<2x128xf32>
    %40 = vector.extract_strided_slice %39 {offsets = [0, 0], sizes = [2, 32], strides = [1, 1]} : vector<2x128xf32> to vector<2x32xf32>
    %41 = vector.extract_strided_slice %39 {offsets = [0, 32], sizes = [2, 32], strides = [1, 1]} : vector<2x128xf32> to vector<2x32xf32>
    %42 = vector.extract_strided_slice %39 {offsets = [0, 96], sizes = [2, 32], strides = [1, 1]} : vector<2x128xf32> to vector<2x32xf32>
    %43 = vector.extract_strided_slice %32 {offsets = [0, 64], sizes = [2, 32], strides = [1, 1]} : vector<2x128xf32> to vector<2x32xf32>
    %44 = math.tanh %43 : vector<2x32xf32>
    %45 = arith.mulf %41, %27 : vector<2x32xf32>
    %46 = arith.mulf %40, %44 : vector<2x32xf32>
    %47 = arith.addf %45, %46 : vector<2x32xf32>
    %48 = math.tanh %47 : vector<2x32xf32>
    %49 = arith.mulf %42, %48 : vector<2x32xf32>
    %50 = vector.extract_strided_slice %7 {offsets = [4, 0], sizes = [2, 128], strides = [1, 1]} : vector<16x128xf32> to vector<2x128xf32>
    %cst_19 = arith.constant dense<0.000000e+00> : vector<2x128xf32>
    %51 = tpu.matmul %49, %0, %cst_19 {dimension_numbers = #tpu.dot_dimension_numbers<[1], [0], [0], [1], [0, 0, 1, 1], [], []>} : vector<2x32xf32>, vector<32x128xf32>, vector<2x128xf32> -> vector<2x128xf32>
    %52 = arith.addf %50, %51 : vector<2x128xf32>
    %cst_20 = arith.constant 5.000000e-01 : f32
    %53 = vector.broadcast %cst_20 : f32 to vector<2x128xf32>
    %54 = arith.mulf %53, %52 : vector<2x128xf32>
    %55 = math.tanh %54 : vector<2x128xf32>
    %cst_21 = arith.constant 5.000000e-01 : f32
    %56 = vector.broadcast %cst_21 : f32 to vector<2x128xf32>
    %57 = arith.mulf %56, %55 : vector<2x128xf32>
    %cst_22 = arith.constant 5.000000e-01 : f32
    %58 = vector.broadcast %cst_22 : f32 to vector<2x128xf32>
    %59 = arith.addf %57, %58 : vector<2x128xf32>
    %60 = vector.extract_strided_slice %59 {offsets = [0, 0], sizes = [2, 32], strides = [1, 1]} : vector<2x128xf32> to vector<2x32xf32>
    %61 = vector.extract_strided_slice %59 {offsets = [0, 32], sizes = [2, 32], strides = [1, 1]} : vector<2x128xf32> to vector<2x32xf32>
    %62 = vector.extract_strided_slice %59 {offsets = [0, 96], sizes = [2, 32], strides = [1, 1]} : vector<2x128xf32> to vector<2x32xf32>
    %63 = vector.extract_strided_slice %52 {offsets = [0, 64], sizes = [2, 32], strides = [1, 1]} : vector<2x128xf32> to vector<2x32xf32>
    %64 = math.tanh %63 : vector<2x32xf32>
    %65 = arith.mulf %61, %47 : vector<2x32xf32>
    %66 = arith.mulf %60, %64 : vector<2x32xf32>
    %67 = arith.addf %65, %66 : vector<2x32xf32>
    %68 = math.tanh %67 : vector<2x32xf32>
    %69 = arith.mulf %62, %68 : vector<2x32xf32>
    %70 = vector.extract_strided_slice %7 {offsets = [6, 0], sizes = [2, 128], strides = [1, 1]} : vector<16x128xf32> to vector<2x128xf32>
    %cst_23 = arith.constant dense<0.000000e+00> : vector<2x128xf32>
    %71 = tpu.matmul %69, %0, %cst_23 {dimension_numbers = #tpu.dot_dimension_numbers<[1], [0], [0], [1], [0, 0, 1, 1], [], []>} : vector<2x32xf32>, vector<32x128xf32>, vector<2x128xf32> -> vector<2x128xf32>
    %72 = arith.addf %70, %71 : vector<2x128xf32>
    %cst_24 = arith.constant 5.000000e-01 : f32
    %73 = vector.broadcast %cst_24 : f32 to vector<2x128xf32>
    %74 = arith.mulf %73, %72 : vector<2x128xf32>
    %75 = math.tanh %74 : vector<2x128xf32>
    %cst_25 = arith.constant 5.000000e-01 : f32
    %76 = vector.broadcast %cst_25 : f32 to vector<2x128xf32>
    %77 = arith.mulf %76, %75 : vector<2x128xf32>
    %cst_26 = arith.constant 5.000000e-01 : f32
    %78 = vector.broadcast %cst_26 : f32 to vector<2x128xf32>
    %79 = arith.addf %77, %78 : vector<2x128xf32>
    %80 = vector.extract_strided_slice %79 {offsets = [0, 0], sizes = [2, 32], strides = [1, 1]} : vector<2x128xf32> to vector<2x32xf32>
    %81 = vector.extract_strided_slice %79 {offsets = [0, 32], sizes = [2, 32], strides = [1, 1]} : vector<2x128xf32> to vector<2x32xf32>
    %82 = vector.extract_strided_slice %79 {offsets = [0, 96], sizes = [2, 32], strides = [1, 1]} : vector<2x128xf32> to vector<2x32xf32>
    %83 = vector.extract_strided_slice %72 {offsets = [0, 64], sizes = [2, 32], strides = [1, 1]} : vector<2x128xf32> to vector<2x32xf32>
    %84 = math.tanh %83 : vector<2x32xf32>
    %85 = arith.mulf %81, %67 : vector<2x32xf32>
    %86 = arith.mulf %80, %84 : vector<2x32xf32>
    %87 = arith.addf %85, %86 : vector<2x32xf32>
    %88 = math.tanh %87 : vector<2x32xf32>
    %89 = arith.mulf %82, %88 : vector<2x32xf32>
    %90 = vector.extract_strided_slice %7 {offsets = [8, 0], sizes = [2, 128], strides = [1, 1]} : vector<16x128xf32> to vector<2x128xf32>
    %cst_27 = arith.constant dense<0.000000e+00> : vector<2x128xf32>
    %91 = tpu.matmul %89, %0, %cst_27 {dimension_numbers = #tpu.dot_dimension_numbers<[1], [0], [0], [1], [0, 0, 1, 1], [], []>} : vector<2x32xf32>, vector<32x128xf32>, vector<2x128xf32> -> vector<2x128xf32>
    %92 = arith.addf %90, %91 : vector<2x128xf32>
    %cst_28 = arith.constant 5.000000e-01 : f32
    %93 = vector.broadcast %cst_28 : f32 to vector<2x128xf32>
    %94 = arith.mulf %93, %92 : vector<2x128xf32>
    %95 = math.tanh %94 : vector<2x128xf32>
    %cst_29 = arith.constant 5.000000e-01 : f32
    %96 = vector.broadcast %cst_29 : f32 to vector<2x128xf32>
    %97 = arith.mulf %96, %95 : vector<2x128xf32>
    %cst_30 = arith.constant 5.000000e-01 : f32
    %98 = vector.broadcast %cst_30 : f32 to vector<2x128xf32>
    %99 = arith.addf %97, %98 : vector<2x128xf32>
    %100 = vector.extract_strided_slice %99 {offsets = [0, 0], sizes = [2, 32], strides = [1, 1]} : vector<2x128xf32> to vector<2x32xf32>
    %101 = vector.extract_strided_slice %99 {offsets = [0, 32], sizes = [2, 32], strides = [1, 1]} : vector<2x128xf32> to vector<2x32xf32>
    %102 = vector.extract_strided_slice %99 {offsets = [0, 96], sizes = [2, 32], strides = [1, 1]} : vector<2x128xf32> to vector<2x32xf32>
    %103 = vector.extract_strided_slice %92 {offsets = [0, 64], sizes = [2, 32], strides = [1, 1]} : vector<2x128xf32> to vector<2x32xf32>
    %104 = math.tanh %103 : vector<2x32xf32>
    %105 = arith.mulf %101, %87 : vector<2x32xf32>
    %106 = arith.mulf %100, %104 : vector<2x32xf32>
    %107 = arith.addf %105, %106 : vector<2x32xf32>
    %108 = math.tanh %107 : vector<2x32xf32>
    %109 = arith.mulf %102, %108 : vector<2x32xf32>
    %110 = vector.extract_strided_slice %7 {offsets = [10, 0], sizes = [2, 128], strides = [1, 1]} : vector<16x128xf32> to vector<2x128xf32>
    %cst_31 = arith.constant dense<0.000000e+00> : vector<2x128xf32>
    %111 = tpu.matmul %109, %0, %cst_31 {dimension_numbers = #tpu.dot_dimension_numbers<[1], [0], [0], [1], [0, 0, 1, 1], [], []>} : vector<2x32xf32>, vector<32x128xf32>, vector<2x128xf32> -> vector<2x128xf32>
    %112 = arith.addf %110, %111 : vector<2x128xf32>
    %cst_32 = arith.constant 5.000000e-01 : f32
    %113 = vector.broadcast %cst_32 : f32 to vector<2x128xf32>
    %114 = arith.mulf %113, %112 : vector<2x128xf32>
    %115 = math.tanh %114 : vector<2x128xf32>
    %cst_33 = arith.constant 5.000000e-01 : f32
    %116 = vector.broadcast %cst_33 : f32 to vector<2x128xf32>
    %117 = arith.mulf %116, %115 : vector<2x128xf32>
    %cst_34 = arith.constant 5.000000e-01 : f32
    %118 = vector.broadcast %cst_34 : f32 to vector<2x128xf32>
    %119 = arith.addf %117, %118 : vector<2x128xf32>
    %120 = vector.extract_strided_slice %119 {offsets = [0, 0], sizes = [2, 32], strides = [1, 1]} : vector<2x128xf32> to vector<2x32xf32>
    %121 = vector.extract_strided_slice %119 {offsets = [0, 32], sizes = [2, 32], strides = [1, 1]} : vector<2x128xf32> to vector<2x32xf32>
    %122 = vector.extract_strided_slice %119 {offsets = [0, 96], sizes = [2, 32], strides = [1, 1]} : vector<2x128xf32> to vector<2x32xf32>
    %123 = vector.extract_strided_slice %112 {offsets = [0, 64], sizes = [2, 32], strides = [1, 1]} : vector<2x128xf32> to vector<2x32xf32>
    %124 = math.tanh %123 : vector<2x32xf32>
    %125 = arith.mulf %121, %107 : vector<2x32xf32>
    %126 = arith.mulf %120, %124 : vector<2x32xf32>
    %127 = arith.addf %125, %126 : vector<2x32xf32>
    %128 = math.tanh %127 : vector<2x32xf32>
    %129 = arith.mulf %122, %128 : vector<2x32xf32>
    %130 = vector.extract_strided_slice %7 {offsets = [12, 0], sizes = [2, 128], strides = [1, 1]} : vector<16x128xf32> to vector<2x128xf32>
    %cst_35 = arith.constant dense<0.000000e+00> : vector<2x128xf32>
    %131 = tpu.matmul %129, %0, %cst_35 {dimension_numbers = #tpu.dot_dimension_numbers<[1], [0], [0], [1], [0, 0, 1, 1], [], []>} : vector<2x32xf32>, vector<32x128xf32>, vector<2x128xf32> -> vector<2x128xf32>
    %132 = arith.addf %130, %131 : vector<2x128xf32>
    %cst_36 = arith.constant 5.000000e-01 : f32
    %133 = vector.broadcast %cst_36 : f32 to vector<2x128xf32>
    %134 = arith.mulf %133, %132 : vector<2x128xf32>
    %135 = math.tanh %134 : vector<2x128xf32>
    %cst_37 = arith.constant 5.000000e-01 : f32
    %136 = vector.broadcast %cst_37 : f32 to vector<2x128xf32>
    %137 = arith.mulf %136, %135 : vector<2x128xf32>
    %cst_38 = arith.constant 5.000000e-01 : f32
    %138 = vector.broadcast %cst_38 : f32 to vector<2x128xf32>
    %139 = arith.addf %137, %138 : vector<2x128xf32>
    %140 = vector.extract_strided_slice %139 {offsets = [0, 0], sizes = [2, 32], strides = [1, 1]} : vector<2x128xf32> to vector<2x32xf32>
    %141 = vector.extract_strided_slice %139 {offsets = [0, 32], sizes = [2, 32], strides = [1, 1]} : vector<2x128xf32> to vector<2x32xf32>
    %142 = vector.extract_strided_slice %139 {offsets = [0, 96], sizes = [2, 32], strides = [1, 1]} : vector<2x128xf32> to vector<2x32xf32>
    %143 = vector.extract_strided_slice %132 {offsets = [0, 64], sizes = [2, 32], strides = [1, 1]} : vector<2x128xf32> to vector<2x32xf32>
    %144 = math.tanh %143 : vector<2x32xf32>
    %145 = arith.mulf %141, %127 : vector<2x32xf32>
    %146 = arith.mulf %140, %144 : vector<2x32xf32>
    %147 = arith.addf %145, %146 : vector<2x32xf32>
    %148 = math.tanh %147 : vector<2x32xf32>
    %149 = arith.mulf %142, %148 : vector<2x32xf32>
    %150 = vector.extract_strided_slice %7 {offsets = [14, 0], sizes = [2, 128], strides = [1, 1]} : vector<16x128xf32> to vector<2x128xf32>
    %cst_39 = arith.constant dense<0.000000e+00> : vector<2x128xf32>
    %151 = tpu.matmul %149, %0, %cst_39 {dimension_numbers = #tpu.dot_dimension_numbers<[1], [0], [0], [1], [0, 0, 1, 1], [], []>} : vector<2x32xf32>, vector<32x128xf32>, vector<2x128xf32> -> vector<2x128xf32>
    %152 = arith.addf %150, %151 : vector<2x128xf32>
    %cst_40 = arith.constant 5.000000e-01 : f32
    %153 = vector.broadcast %cst_40 : f32 to vector<2x128xf32>
    %154 = arith.mulf %153, %152 : vector<2x128xf32>
    %155 = math.tanh %154 : vector<2x128xf32>
    %cst_41 = arith.constant 5.000000e-01 : f32
    %156 = vector.broadcast %cst_41 : f32 to vector<2x128xf32>
    %157 = arith.mulf %156, %155 : vector<2x128xf32>
    %cst_42 = arith.constant 5.000000e-01 : f32
    %158 = vector.broadcast %cst_42 : f32 to vector<2x128xf32>
    %159 = arith.addf %157, %158 : vector<2x128xf32>
    %160 = vector.extract_strided_slice %159 {offsets = [0, 0], sizes = [2, 32], strides = [1, 1]} : vector<2x128xf32> to vector<2x32xf32>
    %161 = vector.extract_strided_slice %159 {offsets = [0, 32], sizes = [2, 32], strides = [1, 1]} : vector<2x128xf32> to vector<2x32xf32>
    %162 = vector.extract_strided_slice %159 {offsets = [0, 96], sizes = [2, 32], strides = [1, 1]} : vector<2x128xf32> to vector<2x32xf32>
    %163 = vector.extract_strided_slice %152 {offsets = [0, 64], sizes = [2, 32], strides = [1, 1]} : vector<2x128xf32> to vector<2x32xf32>
    %164 = math.tanh %163 : vector<2x32xf32>
    %165 = arith.mulf %161, %147 : vector<2x32xf32>
    %166 = arith.mulf %160, %164 : vector<2x32xf32>
    %167 = arith.addf %165, %166 : vector<2x32xf32>
    %168 = math.tanh %167 : vector<2x32xf32>
    %169 = arith.mulf %162, %168 : vector<2x32xf32>
    %170 = tpu.concatenate %29, %49, %69, %89, %109, %129, %149, %169 in 0 : vector<2x32xf32>, vector<2x32xf32>, vector<2x32xf32>, vector<2x32xf32>, vector<2x32xf32>, vector<2x32xf32>, vector<2x32xf32>, vector<2x32xf32> -> vector<16x32xf32>
    %c0_43 = arith.constant 0 : index
    %c0_44 = arith.constant 0 : index
    %171 = vector.load %arg4[%c0_43, %c0_44] : memref<32x128xf32, #tpu.memory_space<vmem>>, vector<32x128xf32>
    %cst_45 = arith.constant dense<0.000000e+00> : vector<16x128xf32>
    %172 = tpu.matmul %170, %171, %cst_45 {dimension_numbers = #tpu.dot_dimension_numbers<[1], [0], [0], [1], [0, 0, 1, 1], [], []>} : vector<16x32xf32>, vector<32x128xf32>, vector<16x128xf32> -> vector<16x128xf32>
    %c0_46 = arith.constant 0 : index
    %c0_47 = arith.constant 0 : index
    %173 = vector.load %arg6[%c0_46, %c0_47] : memref<1x128xf32, #tpu.memory_space<vmem>>, vector<1x128xf32>
    %174 = vector.broadcast %173 : vector<1x128xf32> to vector<16x128xf32>
    %175 = arith.addf %172, %174 : vector<16x128xf32>
    %cst_48 = arith.constant 0.000000e+00 : f32
    %176 = vector.broadcast %cst_48 : f32 to vector<2x32xf32>
    %cst_49 = arith.constant 0.000000e+00 : f32
    %177 = vector.broadcast %cst_49 : f32 to vector<2x32xf32>
    %178 = vector.extract_strided_slice %175 {offsets = [0, 0], sizes = [2, 128], strides = [1, 1]} : vector<16x128xf32> to vector<2x128xf32>
    %cst_50 = arith.constant dense<0.000000e+00> : vector<2x128xf32>
    %179 = tpu.matmul %176, %1, %cst_50 {dimension_numbers = #tpu.dot_dimension_numbers<[1], [0], [0], [1], [0, 0, 1, 1], [], []>} : vector<2x32xf32>, vector<32x128xf32>, vector<2x128xf32> -> vector<2x128xf32>
    %180 = arith.addf %178, %179 : vector<2x128xf32>
    %cst_51 = arith.constant 5.000000e-01 : f32
    %181 = vector.broadcast %cst_51 : f32 to vector<2x128xf32>
    %182 = arith.mulf %181, %180 : vector<2x128xf32>
    %183 = math.tanh %182 : vector<2x128xf32>
    %cst_52 = arith.constant 5.000000e-01 : f32
    %184 = vector.broadcast %cst_52 : f32 to vector<2x128xf32>
    %185 = arith.mulf %184, %183 : vector<2x128xf32>
    %cst_53 = arith.constant 5.000000e-01 : f32
    %186 = vector.broadcast %cst_53 : f32 to vector<2x128xf32>
    %187 = arith.addf %185, %186 : vector<2x128xf32>
    %188 = vector.extract_strided_slice %187 {offsets = [0, 0], sizes = [2, 32], strides = [1, 1]} : vector<2x128xf32> to vector<2x32xf32>
    %189 = vector.extract_strided_slice %187 {offsets = [0, 32], sizes = [2, 32], strides = [1, 1]} : vector<2x128xf32> to vector<2x32xf32>
    %190 = vector.extract_strided_slice %187 {offsets = [0, 96], sizes = [2, 32], strides = [1, 1]} : vector<2x128xf32> to vector<2x32xf32>
    %191 = vector.extract_strided_slice %180 {offsets = [0, 64], sizes = [2, 32], strides = [1, 1]} : vector<2x128xf32> to vector<2x32xf32>
    %192 = math.tanh %191 : vector<2x32xf32>
    %193 = arith.mulf %189, %177 : vector<2x32xf32>
    %194 = arith.mulf %188, %192 : vector<2x32xf32>
    %195 = arith.addf %193, %194 : vector<2x32xf32>
    %196 = math.tanh %195 : vector<2x32xf32>
    %197 = arith.mulf %190, %196 : vector<2x32xf32>
    %198 = vector.extract_strided_slice %175 {offsets = [2, 0], sizes = [2, 128], strides = [1, 1]} : vector<16x128xf32> to vector<2x128xf32>
    %cst_54 = arith.constant dense<0.000000e+00> : vector<2x128xf32>
    %199 = tpu.matmul %197, %1, %cst_54 {dimension_numbers = #tpu.dot_dimension_numbers<[1], [0], [0], [1], [0, 0, 1, 1], [], []>} : vector<2x32xf32>, vector<32x128xf32>, vector<2x128xf32> -> vector<2x128xf32>
    %200 = arith.addf %198, %199 : vector<2x128xf32>
    %cst_55 = arith.constant 5.000000e-01 : f32
    %201 = vector.broadcast %cst_55 : f32 to vector<2x128xf32>
    %202 = arith.mulf %201, %200 : vector<2x128xf32>
    %203 = math.tanh %202 : vector<2x128xf32>
    %cst_56 = arith.constant 5.000000e-01 : f32
    %204 = vector.broadcast %cst_56 : f32 to vector<2x128xf32>
    %205 = arith.mulf %204, %203 : vector<2x128xf32>
    %cst_57 = arith.constant 5.000000e-01 : f32
    %206 = vector.broadcast %cst_57 : f32 to vector<2x128xf32>
    %207 = arith.addf %205, %206 : vector<2x128xf32>
    %208 = vector.extract_strided_slice %207 {offsets = [0, 0], sizes = [2, 32], strides = [1, 1]} : vector<2x128xf32> to vector<2x32xf32>
    %209 = vector.extract_strided_slice %207 {offsets = [0, 32], sizes = [2, 32], strides = [1, 1]} : vector<2x128xf32> to vector<2x32xf32>
    %210 = vector.extract_strided_slice %207 {offsets = [0, 96], sizes = [2, 32], strides = [1, 1]} : vector<2x128xf32> to vector<2x32xf32>
    %211 = vector.extract_strided_slice %200 {offsets = [0, 64], sizes = [2, 32], strides = [1, 1]} : vector<2x128xf32> to vector<2x32xf32>
    %212 = math.tanh %211 : vector<2x32xf32>
    %213 = arith.mulf %209, %195 : vector<2x32xf32>
    %214 = arith.mulf %208, %212 : vector<2x32xf32>
    %215 = arith.addf %213, %214 : vector<2x32xf32>
    %216 = math.tanh %215 : vector<2x32xf32>
    %217 = arith.mulf %210, %216 : vector<2x32xf32>
    %218 = vector.extract_strided_slice %175 {offsets = [4, 0], sizes = [2, 128], strides = [1, 1]} : vector<16x128xf32> to vector<2x128xf32>
    %cst_58 = arith.constant dense<0.000000e+00> : vector<2x128xf32>
    %219 = tpu.matmul %217, %1, %cst_58 {dimension_numbers = #tpu.dot_dimension_numbers<[1], [0], [0], [1], [0, 0, 1, 1], [], []>} : vector<2x32xf32>, vector<32x128xf32>, vector<2x128xf32> -> vector<2x128xf32>
    %220 = arith.addf %218, %219 : vector<2x128xf32>
    %cst_59 = arith.constant 5.000000e-01 : f32
    %221 = vector.broadcast %cst_59 : f32 to vector<2x128xf32>
    %222 = arith.mulf %221, %220 : vector<2x128xf32>
    %223 = math.tanh %222 : vector<2x128xf32>
    %cst_60 = arith.constant 5.000000e-01 : f32
    %224 = vector.broadcast %cst_60 : f32 to vector<2x128xf32>
    %225 = arith.mulf %224, %223 : vector<2x128xf32>
    %cst_61 = arith.constant 5.000000e-01 : f32
    %226 = vector.broadcast %cst_61 : f32 to vector<2x128xf32>
    %227 = arith.addf %225, %226 : vector<2x128xf32>
    %228 = vector.extract_strided_slice %227 {offsets = [0, 0], sizes = [2, 32], strides = [1, 1]} : vector<2x128xf32> to vector<2x32xf32>
    %229 = vector.extract_strided_slice %227 {offsets = [0, 32], sizes = [2, 32], strides = [1, 1]} : vector<2x128xf32> to vector<2x32xf32>
    %230 = vector.extract_strided_slice %227 {offsets = [0, 96], sizes = [2, 32], strides = [1, 1]} : vector<2x128xf32> to vector<2x32xf32>
    %231 = vector.extract_strided_slice %220 {offsets = [0, 64], sizes = [2, 32], strides = [1, 1]} : vector<2x128xf32> to vector<2x32xf32>
    %232 = math.tanh %231 : vector<2x32xf32>
    %233 = arith.mulf %229, %215 : vector<2x32xf32>
    %234 = arith.mulf %228, %232 : vector<2x32xf32>
    %235 = arith.addf %233, %234 : vector<2x32xf32>
    %236 = math.tanh %235 : vector<2x32xf32>
    %237 = arith.mulf %230, %236 : vector<2x32xf32>
    %238 = vector.extract_strided_slice %175 {offsets = [6, 0], sizes = [2, 128], strides = [1, 1]} : vector<16x128xf32> to vector<2x128xf32>
    %cst_62 = arith.constant dense<0.000000e+00> : vector<2x128xf32>
    %239 = tpu.matmul %237, %1, %cst_62 {dimension_numbers = #tpu.dot_dimension_numbers<[1], [0], [0], [1], [0, 0, 1, 1], [], []>} : vector<2x32xf32>, vector<32x128xf32>, vector<2x128xf32> -> vector<2x128xf32>
    %240 = arith.addf %238, %239 : vector<2x128xf32>
    %cst_63 = arith.constant 5.000000e-01 : f32
    %241 = vector.broadcast %cst_63 : f32 to vector<2x128xf32>
    %242 = arith.mulf %241, %240 : vector<2x128xf32>
    %243 = math.tanh %242 : vector<2x128xf32>
    %cst_64 = arith.constant 5.000000e-01 : f32
    %244 = vector.broadcast %cst_64 : f32 to vector<2x128xf32>
    %245 = arith.mulf %244, %243 : vector<2x128xf32>
    %cst_65 = arith.constant 5.000000e-01 : f32
    %246 = vector.broadcast %cst_65 : f32 to vector<2x128xf32>
    %247 = arith.addf %245, %246 : vector<2x128xf32>
    %248 = vector.extract_strided_slice %247 {offsets = [0, 0], sizes = [2, 32], strides = [1, 1]} : vector<2x128xf32> to vector<2x32xf32>
    %249 = vector.extract_strided_slice %247 {offsets = [0, 32], sizes = [2, 32], strides = [1, 1]} : vector<2x128xf32> to vector<2x32xf32>
    %250 = vector.extract_strided_slice %247 {offsets = [0, 96], sizes = [2, 32], strides = [1, 1]} : vector<2x128xf32> to vector<2x32xf32>
    %251 = vector.extract_strided_slice %240 {offsets = [0, 64], sizes = [2, 32], strides = [1, 1]} : vector<2x128xf32> to vector<2x32xf32>
    %252 = math.tanh %251 : vector<2x32xf32>
    %253 = arith.mulf %249, %235 : vector<2x32xf32>
    %254 = arith.mulf %248, %252 : vector<2x32xf32>
    %255 = arith.addf %253, %254 : vector<2x32xf32>
    %256 = math.tanh %255 : vector<2x32xf32>
    %257 = arith.mulf %250, %256 : vector<2x32xf32>
    %258 = vector.extract_strided_slice %175 {offsets = [8, 0], sizes = [2, 128], strides = [1, 1]} : vector<16x128xf32> to vector<2x128xf32>
    %cst_66 = arith.constant dense<0.000000e+00> : vector<2x128xf32>
    %259 = tpu.matmul %257, %1, %cst_66 {dimension_numbers = #tpu.dot_dimension_numbers<[1], [0], [0], [1], [0, 0, 1, 1], [], []>} : vector<2x32xf32>, vector<32x128xf32>, vector<2x128xf32> -> vector<2x128xf32>
    %260 = arith.addf %258, %259 : vector<2x128xf32>
    %cst_67 = arith.constant 5.000000e-01 : f32
    %261 = vector.broadcast %cst_67 : f32 to vector<2x128xf32>
    %262 = arith.mulf %261, %260 : vector<2x128xf32>
    %263 = math.tanh %262 : vector<2x128xf32>
    %cst_68 = arith.constant 5.000000e-01 : f32
    %264 = vector.broadcast %cst_68 : f32 to vector<2x128xf32>
    %265 = arith.mulf %264, %263 : vector<2x128xf32>
    %cst_69 = arith.constant 5.000000e-01 : f32
    %266 = vector.broadcast %cst_69 : f32 to vector<2x128xf32>
    %267 = arith.addf %265, %266 : vector<2x128xf32>
    %268 = vector.extract_strided_slice %267 {offsets = [0, 0], sizes = [2, 32], strides = [1, 1]} : vector<2x128xf32> to vector<2x32xf32>
    %269 = vector.extract_strided_slice %267 {offsets = [0, 32], sizes = [2, 32], strides = [1, 1]} : vector<2x128xf32> to vector<2x32xf32>
    %270 = vector.extract_strided_slice %267 {offsets = [0, 96], sizes = [2, 32], strides = [1, 1]} : vector<2x128xf32> to vector<2x32xf32>
    %271 = vector.extract_strided_slice %260 {offsets = [0, 64], sizes = [2, 32], strides = [1, 1]} : vector<2x128xf32> to vector<2x32xf32>
    %272 = math.tanh %271 : vector<2x32xf32>
    %273 = arith.mulf %269, %255 : vector<2x32xf32>
    %274 = arith.mulf %268, %272 : vector<2x32xf32>
    %275 = arith.addf %273, %274 : vector<2x32xf32>
    %276 = math.tanh %275 : vector<2x32xf32>
    %277 = arith.mulf %270, %276 : vector<2x32xf32>
    %278 = vector.extract_strided_slice %175 {offsets = [10, 0], sizes = [2, 128], strides = [1, 1]} : vector<16x128xf32> to vector<2x128xf32>
    %cst_70 = arith.constant dense<0.000000e+00> : vector<2x128xf32>
    %279 = tpu.matmul %277, %1, %cst_70 {dimension_numbers = #tpu.dot_dimension_numbers<[1], [0], [0], [1], [0, 0, 1, 1], [], []>} : vector<2x32xf32>, vector<32x128xf32>, vector<2x128xf32> -> vector<2x128xf32>
    %280 = arith.addf %278, %279 : vector<2x128xf32>
    %cst_71 = arith.constant 5.000000e-01 : f32
    %281 = vector.broadcast %cst_71 : f32 to vector<2x128xf32>
    %282 = arith.mulf %281, %280 : vector<2x128xf32>
    %283 = math.tanh %282 : vector<2x128xf32>
    %cst_72 = arith.constant 5.000000e-01 : f32
    %284 = vector.broadcast %cst_72 : f32 to vector<2x128xf32>
    %285 = arith.mulf %284, %283 : vector<2x128xf32>
    %cst_73 = arith.constant 5.000000e-01 : f32
    %286 = vector.broadcast %cst_73 : f32 to vector<2x128xf32>
    %287 = arith.addf %285, %286 : vector<2x128xf32>
    %288 = vector.extract_strided_slice %287 {offsets = [0, 0], sizes = [2, 32], strides = [1, 1]} : vector<2x128xf32> to vector<2x32xf32>
    %289 = vector.extract_strided_slice %287 {offsets = [0, 32], sizes = [2, 32], strides = [1, 1]} : vector<2x128xf32> to vector<2x32xf32>
    %290 = vector.extract_strided_slice %287 {offsets = [0, 96], sizes = [2, 32], strides = [1, 1]} : vector<2x128xf32> to vector<2x32xf32>
    %291 = vector.extract_strided_slice %280 {offsets = [0, 64], sizes = [2, 32], strides = [1, 1]} : vector<2x128xf32> to vector<2x32xf32>
    %292 = math.tanh %291 : vector<2x32xf32>
    %293 = arith.mulf %289, %275 : vector<2x32xf32>
    %294 = arith.mulf %288, %292 : vector<2x32xf32>
    %295 = arith.addf %293, %294 : vector<2x32xf32>
    %296 = math.tanh %295 : vector<2x32xf32>
    %297 = arith.mulf %290, %296 : vector<2x32xf32>
    %298 = vector.extract_strided_slice %175 {offsets = [12, 0], sizes = [2, 128], strides = [1, 1]} : vector<16x128xf32> to vector<2x128xf32>
    %cst_74 = arith.constant dense<0.000000e+00> : vector<2x128xf32>
    %299 = tpu.matmul %297, %1, %cst_74 {dimension_numbers = #tpu.dot_dimension_numbers<[1], [0], [0], [1], [0, 0, 1, 1], [], []>} : vector<2x32xf32>, vector<32x128xf32>, vector<2x128xf32> -> vector<2x128xf32>
    %300 = arith.addf %298, %299 : vector<2x128xf32>
    %cst_75 = arith.constant 5.000000e-01 : f32
    %301 = vector.broadcast %cst_75 : f32 to vector<2x128xf32>
    %302 = arith.mulf %301, %300 : vector<2x128xf32>
    %303 = math.tanh %302 : vector<2x128xf32>
    %cst_76 = arith.constant 5.000000e-01 : f32
    %304 = vector.broadcast %cst_76 : f32 to vector<2x128xf32>
    %305 = arith.mulf %304, %303 : vector<2x128xf32>
    %cst_77 = arith.constant 5.000000e-01 : f32
    %306 = vector.broadcast %cst_77 : f32 to vector<2x128xf32>
    %307 = arith.addf %305, %306 : vector<2x128xf32>
    %308 = vector.extract_strided_slice %307 {offsets = [0, 0], sizes = [2, 32], strides = [1, 1]} : vector<2x128xf32> to vector<2x32xf32>
    %309 = vector.extract_strided_slice %307 {offsets = [0, 32], sizes = [2, 32], strides = [1, 1]} : vector<2x128xf32> to vector<2x32xf32>
    %310 = vector.extract_strided_slice %307 {offsets = [0, 96], sizes = [2, 32], strides = [1, 1]} : vector<2x128xf32> to vector<2x32xf32>
    %311 = vector.extract_strided_slice %300 {offsets = [0, 64], sizes = [2, 32], strides = [1, 1]} : vector<2x128xf32> to vector<2x32xf32>
    %312 = math.tanh %311 : vector<2x32xf32>
    %313 = arith.mulf %309, %295 : vector<2x32xf32>
    %314 = arith.mulf %308, %312 : vector<2x32xf32>
    %315 = arith.addf %313, %314 : vector<2x32xf32>
    %316 = math.tanh %315 : vector<2x32xf32>
    %317 = arith.mulf %310, %316 : vector<2x32xf32>
    %318 = vector.extract_strided_slice %175 {offsets = [14, 0], sizes = [2, 128], strides = [1, 1]} : vector<16x128xf32> to vector<2x128xf32>
    %cst_78 = arith.constant dense<0.000000e+00> : vector<2x128xf32>
    %319 = tpu.matmul %317, %1, %cst_78 {dimension_numbers = #tpu.dot_dimension_numbers<[1], [0], [0], [1], [0, 0, 1, 1], [], []>} : vector<2x32xf32>, vector<32x128xf32>, vector<2x128xf32> -> vector<2x128xf32>
    %320 = arith.addf %318, %319 : vector<2x128xf32>
    %cst_79 = arith.constant 5.000000e-01 : f32
    %321 = vector.broadcast %cst_79 : f32 to vector<2x128xf32>
    %322 = arith.mulf %321, %320 : vector<2x128xf32>
    %323 = math.tanh %322 : vector<2x128xf32>
    %cst_80 = arith.constant 5.000000e-01 : f32
    %324 = vector.broadcast %cst_80 : f32 to vector<2x128xf32>
    %325 = arith.mulf %324, %323 : vector<2x128xf32>
    %cst_81 = arith.constant 5.000000e-01 : f32
    %326 = vector.broadcast %cst_81 : f32 to vector<2x128xf32>
    %327 = arith.addf %325, %326 : vector<2x128xf32>
    %328 = vector.extract_strided_slice %327 {offsets = [0, 0], sizes = [2, 32], strides = [1, 1]} : vector<2x128xf32> to vector<2x32xf32>
    %329 = vector.extract_strided_slice %327 {offsets = [0, 32], sizes = [2, 32], strides = [1, 1]} : vector<2x128xf32> to vector<2x32xf32>
    %330 = vector.extract_strided_slice %327 {offsets = [0, 96], sizes = [2, 32], strides = [1, 1]} : vector<2x128xf32> to vector<2x32xf32>
    %331 = vector.extract_strided_slice %320 {offsets = [0, 64], sizes = [2, 32], strides = [1, 1]} : vector<2x128xf32> to vector<2x32xf32>
    %332 = math.tanh %331 : vector<2x32xf32>
    %333 = arith.mulf %329, %315 : vector<2x32xf32>
    %334 = arith.mulf %328, %332 : vector<2x32xf32>
    %335 = arith.addf %333, %334 : vector<2x32xf32>
    %336 = math.tanh %335 : vector<2x32xf32>
    %337 = arith.mulf %330, %336 : vector<2x32xf32>
    %c0_82 = arith.constant 0 : index
    %c0_83 = arith.constant 0 : index
    %338 = vector.load %arg7[%c0_82, %c0_83] : memref<32x4xf32, #tpu.memory_space<vmem>>, vector<32x4xf32>
    %cst_84 = arith.constant dense<0.000000e+00> : vector<2x4xf32>
    %339 = tpu.matmul %337, %338, %cst_84 {dimension_numbers = #tpu.dot_dimension_numbers<[1], [0], [0], [1], [0, 0, 1, 1], [], []>} : vector<2x32xf32>, vector<32x4xf32>, vector<2x4xf32> -> vector<2x4xf32>
    %c0_85 = arith.constant 0 : index
    %c0_86 = arith.constant 0 : index
    %340 = vector.load %arg8[%c0_85, %c0_86] : memref<1x4xf32, #tpu.memory_space<vmem>>, vector<1x4xf32>
    %341 = vector.broadcast %340 : vector<1x4xf32> to vector<2x4xf32>
    %342 = arith.addf %339, %341 : vector<2x4xf32>
    %c0_87 = arith.constant 0 : index
    %c0_88 = arith.constant 0 : index
    %343 = vector.load %arg9[%c0_87, %c0_88] : memref<2x4xf32, #tpu.memory_space<vmem>>, vector<2x4xf32>
    tpu.vector_store %arg9[%c0_87, %c0_88], %342 {strides = array<i32>} : memref<2x4xf32, #tpu.memory_space<vmem>>, vector<2x4xf32>,
    return
  }
}

</mosaic_0001>

<llo_original>
// kernel: jr_inv_lstm_forward.1
$region0: #{jr_inv_lstm_forward.1}
  #allocation0 [shape = 'u32[]', space=smem, size = 0x4, offset = 0x4, fixed_abs, tag = 'smem constant byte address 0x4 - core index']
  #allocation1 [shape = 'u32[144,128]{1,0:T(1,128)}', space=vmem, size = 0x12000, scoped, tag = 'internal scratch']
  %s0 = inlined_call_operand.vmem [shape: f32[16,4], index: 0, kind: input, shape index: {}]
  %s1 = inlined_call_operand.vmem [shape: f32[4,128], index: 1, kind: input, shape index: {}]
  %s2 = inlined_call_operand.vmem [shape: f32[32,128], index: 2, kind: input, shape index: {}]
  %s3 = inlined_call_operand.vmem [shape: f32[1,128], index: 3, kind: input, shape index: {}]
  %s4 = inlined_call_operand.vmem [shape: f32[32,128], index: 4, kind: input, shape index: {}]
  %s5 = inlined_call_operand.hbm [shape: f32[32,128], index: 5, kind: input, shape index: {}]
  %s6 = inlined_call_operand.vmem [shape: f32[1,128], index: 6, kind: input, shape index: {}]
  %s7 = inlined_call_operand.vmem [shape: f32[32,4], index: 7, kind: input, shape index: {}]
  %s8 = inlined_call_operand.vmem [shape: f32[1,4], index: 8, kind: input, shape index: {}]
  %s9 = inlined_call_operand.hbm [shape: f32[2,4], index: 9, kind: output, shape index: {}]
  %s10 = sld [smem:[#allocation0]]
  $region50: #{jr_inv_lstm_forward.1} parent=0
    _
  %s12 = ssub.s32 1, %s10
  %s13 = scalar_select 0, %s12, %s10
  $region1: #{jr_inv_lstm_forward.1} parent=0
    #allocation2 [shape = 'u8[16384]{0}', space=vmem, size = 0x4000, scoped, tag = 'input window, operand 5, single buffered']
    #allocation3 [shape = 's32[1]{0}', space=sflag, size = 0x4, scoped, tag = 'scoped memory for jr_inv_lstm_forward.1']
    #allocation4 [shape = 's32[1]{0}', space=sflag, size = 0x4, scoped, tag = 'scoped memory for jr_inv_lstm_forward.1']
    #allocation5 [shape = 'u8[1024]{0}', space=vmem, size = 0x400, scoped, tag = 'output window, operand 0, single buffered']
    %14 = vsyncpa [#allocation3], 0
    %15 = vsyncpa [#allocation4], 0
    // Predicated region
    $region2: #{jr_inv_lstm_forward.1} parent=1 // pred_check
      _
    $region3: #{jr_inv_lstm_forward.1} parent=1 // pred_check_branch
      %17 = sbr.rel (0) target = $region5
    $region4: #{jr_inv_lstm_forward.1} parent=1 // pred_region
      _
    $region5: #{jr_inv_lstm_forward.1} parent=1 // pred_fallthru
      _
    // Predicated region
    $region6: #{jr_inv_lstm_forward.1} parent=1 // pred_check
      _
    $region7: #{jr_inv_lstm_forward.1} parent=1 // pred_check_branch
      %19 = sbr.rel (0) target = $region9
    $region8: #{jr_inv_lstm_forward.1} parent=1 // pred_region
      _
    $region9: #{jr_inv_lstm_forward.1} parent=1 // pred_fallthru
      _
    // Predicated region
    $region10: #{jr_inv_lstm_forward.1} parent=1 // pred_check
      _
    $region11: #{jr_inv_lstm_forward.1} parent=1 // pred_check_branch
      %21 = sbr.rel (0) target = $region13
    $region12: #{jr_inv_lstm_forward.1} parent=1 // pred_region
      _
    $region13: #{jr_inv_lstm_forward.1} parent=1 // pred_fallthru
      _
    // Predicated region
    $region14: #{jr_inv_lstm_forward.1} parent=1 // pred_check
      _
    $region15: #{jr_inv_lstm_forward.1} parent=1 // pred_check_branch
      %23 = sbr.rel (0) target = $region17
    $region16: #{jr_inv_lstm_forward.1} parent=1 // pred_region
      _
    $region17: #{jr_inv_lstm_forward.1} parent=1 // pred_fallthru
      _
    // Predicated region
    $region18: #{jr_inv_lstm_forward.1} parent=1 // pred_check
      _
    $region19: #{jr_inv_lstm_forward.1} parent=1 // pred_check_branch
      %25 = sbr.rel (0) target = $region21
    $region20: #{jr_inv_lstm_forward.1} parent=1 // pred_region
      _
    $region21: #{jr_inv_lstm_forward.1} parent=1 // pred_fallthru
      _
    // Predicated region
    $region22: #{jr_inv_lstm_forward.1} parent=1 // pred_check
      _
    $region23: #{jr_inv_lstm_forward.1} parent=1 // pred_check_branch
      %27 = sbr.rel (0) target = $region25
    $region24: #{jr_inv_lstm_forward.1} parent=1 // pred_region
      %s29 = ssub.s32 512, 512
      %30 = vsyncadd [#allocation3], %s29
      %s31 = sshll.u32 [#allocation2], 4
      %s32 = int_to_ptr.vmem [resolvable:$true] %s31
      %37 = dma.hbm_to_vmem [thread:$0]  %s5, 512, %s32, [#allocation3], 128, 128, 8
    $region25: #{jr_inv_lstm_forward.1} parent=1 // pred_fallthru
      _
    // Predicated region
    $region26: #{jr_inv_lstm_forward.1} parent=1 // pred_check
      _
    $region27: #{jr_inv_lstm_forward.1} parent=1 // pred_check_branch
      %39 = sbr.rel (0) target = $region29
    $region28: #{jr_inv_lstm_forward.1} parent=1 // pred_region
      _
    $region29: #{jr_inv_lstm_forward.1} parent=1 // pred_fallthru
      _
    // Predicated region
    $region30: #{jr_inv_lstm_forward.1} parent=1 // pred_check
      _
    $region31: #{jr_inv_lstm_forward.1} parent=1 // pred_check_branch
      %41 = sbr.rel (0) target = $region33
    $region32: #{jr_inv_lstm_forward.1} parent=1 // pred_region
      _
    $region33: #{jr_inv_lstm_forward.1} parent=1 // pred_fallthru
      _
    // Predicated region
    $region34: #{jr_inv_lstm_forward.1} parent=1 // pred_check
      _
    $region35: #{jr_inv_lstm_forward.1} parent=1 // pred_check_branch
      %43 = sbr.rel (0) target = $region37
    $region36: #{jr_inv_lstm_forward.1} parent=1 // pred_region
      _
    $region37: #{jr_inv_lstm_forward.1} parent=1 // pred_fallthru
      _
    // Predicated region
    $region38: #{jr_inv_lstm_forward.1} parent=1 // pred_check
      _
    $region39: #{jr_inv_lstm_forward.1} parent=1 // pred_check_branch
      %45 = sbr.rel (0) target = $region41
    $region40: #{jr_inv_lstm_forward.1} parent=1 // pred_region
      %46 = dma.done [#allocation3], 512
    $region41: #{jr_inv_lstm_forward.1} parent=1 // pred_fallthru
      _
    %v47 = vld [vmem:[%s2] sm:$0xff]
    %v48 = vld [vmem:[%s2 + $0x8] sm:$0xff]
    %v49 = vld [vmem:[%s2 + $0x10] sm:$0xff]
    %v50 = vld [vmem:[%s2 + $0x18] sm:$0xff]
    %v51 = vld [vmem:[#allocation2] sm:$0xff]
    %v52 = vld [vmem:[#allocation2 + $0x8] sm:$0xff]
    %v53 = vld [vmem:[#allocation2 + $0x10] sm:$0xff]
    %v54 = vld [vmem:[#allocation2 + $0x18] sm:$0xff]
    %v55 = vld [vmem:[%s0] sm:$0xff]
    %v56 = vld [vmem:[%s0 + $0x8] sm:$0xff]
    %v57 = vld [vmem:[%s1] sm:$0xf]
    %v58 = vld [vmem:[%s3] sm:$0x1]
    %v60 = vlaneseq
    %v61 = vshrl.u32 %v60, 7
    %v62 = vsub.s32 0, %v61
    %v63 = vrot.slane %v58, %v62
    %vm65 = vcmask 31744
    %v67 = vsel %vm65, %v55, 0
    %v70 = vsel %vm65, %v56, 0
    %vm72 = vcmask 1043456
    %v74 = vsel %vm72, %v57, 0
    %76 = vmatprep.subr.mxu0 0.0
    %77 = vmatpush1.msra.mxu0 %v74
    %78 = vmatprep.subr.mxu0 0.0
    %79 = vmatpush1.msra.mxu0 0.0
    %80 = vmatprep.subr.mxu0 0.0
    %81 = vmatpush1.msra.mxu0 0.0
    %82 = vmatprep.subr.mxu0 0.0
    %83 = vmatpush1.msra.mxu0 0.0
    %84 = vmatprep.subr.mxu0 0.0
    %85 = vmatpush1.msra.mxu0 0.0
    %86 = vmatprep.subr.mxu0 0.0
    %87 = vmatpush1.msra.mxu0 0.0
    %88 = vmatprep.subr.mxu0 0.0
    %89 = vmatpush1.msra.mxu0 0.0
    %90 = vmatprep.subr.mxu0 0.0
    %91 = vmatpush1.msra.mxu0 0.0
    %92 = vmatprep.subr.mxu0 0.0
    %93 = vmatpush1.msra.mxu0 0.0
    %94 = vmatprep.subr.mxu0 0.0
    %95 = vmatpush1.msra.mxu0 0.0
    %96 = vmatprep.subr.mxu0 0.0
    %97 = vmatpush1.msra.mxu0 0.0
    %98 = vmatprep.subr.mxu0 0.0
    %99 = vmatpush1.msra.mxu0 0.0
    %100 = vmatprep.subr.mxu0 0.0
    %101 = vmatpush1.msra.mxu0 0.0
    %102 = vmatprep.subr.mxu0 0.0
    %103 = vmatpush1.msra.mxu0 0.0
    %104 = vmatprep.subr.mxu0 0.0
    %105 = vmatpush1.msra.mxu0 0.0
    %106 = vmatprep.subr.mxu0 0.0
    %107 = vmatpush1.msra.mxu0 0.0
    %108 = vmatprep.subr.mxu0 0.0
    %109 = vmatpush1.msra.mxu0 0.0
    %110 = vmatprep.subr.mxu0 0.0
    %111 = vmatpush1.msra.mxu0 0.0
    %112 = vmatprep.subr.mxu0 0.0
    %113 = vmatpush1.msra.mxu0 0.0
    %114 = vmatprep.subr.mxu0 0.0
    %115 = vmatpush1.msra.mxu0 0.0
    %116 = vmatprep.subr.mxu0 0.0
    %117 = vmatpush1.msra.mxu0 0.0
    %118 = vmatprep.subr.mxu0 0.0
    %119 = vmatpush1.msra.mxu0 0.0
    %120 = vmatprep.subr.mxu0 0.0
    %121 = vmatpush1.msra.mxu0 0.0
    %122 = vmatprep.subr.mxu0 0.0
    %123 = vmatpush1.msra.mxu0 0.0
    %124 = vmatprep.subr.mxu0 0.0
    %125 = vmatpush1.msra.mxu0 0.0
    %126 = vmatprep.subr.mxu0 0.0
    %127 = vmatpush1.msra.mxu0 0.0
    %128 = vmatprep.subr.mxu0 0.0
    %129 = vmatpush1.msra.mxu0 0.0
    %130 = vmatprep.subr.mxu0 0.0
    %131 = vmatpush1.msra.mxu0 0.0
    %132 = vmatprep.subr.mxu0 0.0
    %133 = vmatpush1.msra.mxu0 0.0
    %134 = vmatprep.subr.mxu0 0.0
    %135 = vmatpush1.msra.mxu0 0.0
    %136 = vmatprep.subr.mxu0 0.0
    %137 = vmatpush1.msra.mxu0 0.0
    %138 = vmatprep.subr.mxu0 0.0
    %139 = vmatpush1.msra.mxu0 0.0
    %140 = vmatprep.mubr.f32.mxu0 0.0
    %141 = vmatmul.mubr.f32.gmra.mrb[0].mxu0 %v67
    %v142 = vpop.f32.mrb[0].mxu0
    %v143 = vadd.f32 %v63, %v142
    %v144 = vpop.f32.mrb[0].mxu0
    %145 = vmatprep.mubr.f32.mxu0 0.0
    %146 = vmatmul.mubr.f32.gmra.mrb[0].mxu0 %v70
    %v147 = vpop.f32.mrb[0].mxu0
    %v148 = vadd.f32 %v63, %v147
    %v149 = vpop.f32.mrb[0].mxu0
    %150 = vdwg.mxu0
    %vm151 = vcmask 261120
    %v153 = vsel %vm151, 0.0, 0
    %155 = vmatprep.subr.mxu0 0.0
    %156 = vmatpush1.msra.mxu0 %v47
    %157 = vmatprep.subr.mxu0 0.0
    %158 = vmatpush1.msra.mxu0 %v48
    %159 = vmatprep.subr.mxu0 0.0
    %160 = vmatpush1.msra.mxu0 %v49
    %161 = vmatprep.subr.mxu0 0.0
    %162 = vmatpush1.msra.mxu0 %v50
    %163 = vmatprep.subr.mxu0 0.0
    %164 = vmatpush1.msra.mxu0 0.0
    %165 = vmatprep.subr.mxu0 0.0
    %166 = vmatpush1.msra.mxu0 0.0
    %167 = vmatprep.subr.mxu0 0.0
    %168 = vmatpush1.msra.mxu0 0.0
    %169 = vmatprep.subr.mxu0 0.0
    %170 = vmatpush1.msra.mxu0 0.0
    %171 = vmatprep.subr.mxu0 0.0
    %172 = vmatpush1.msra.mxu0 0.0
    %173 = vmatprep.subr.mxu0 0.0
    %174 = vmatpush1.msra.mxu0 0.0
    %175 = vmatprep.subr.mxu0 0.0
    %176 = vmatpush1.msra.mxu0 0.0
    %177 = vmatprep.subr.mxu0 0.0
    %178 = vmatpush1.msra.mxu0 0.0
    %179 = vmatprep.subr.mxu0 0.0
    %180 = vmatpush1.msra.mxu0 0.0
    %181 = vmatprep.subr.mxu0 0.0
    %182 = vmatpush1.msra.mxu0 0.0
    %183 = vmatprep.subr.mxu0 0.0
    %184 = vmatpush1.msra.mxu0 0.0
    %185 = vmatprep.subr.mxu0 0.0
    %186 = vmatpush1.msra.mxu0 0.0
    %187 = vmatprep.subr.mxu0 0.0
    %188 = vmatpush1.msra.mxu0 0.0
    %189 = vmatprep.subr.mxu0 0.0
    %190 = vmatpush1.msra.mxu0 0.0
    %191 = vmatprep.subr.mxu0 0.0
    %192 = vmatpush1.msra.mxu0 0.0
    %193 = vmatprep.subr.mxu0 0.0
    %194 = vmatpush1.msra.mxu0 0.0
    %195 = vmatprep.subr.mxu0 0.0
    %196 = vmatpush1.msra.mxu0 0.0
    %197 = vmatprep.subr.mxu0 0.0
    %198 = vmatpush1.msra.mxu0 0.0
    %199 = vmatprep.subr.mxu0 0.0
    %200 = vmatpush1.msra.mxu0 0.0
    %201 = vmatprep.subr.mxu0 0.0
    %202 = vmatpush1.msra.mxu0 0.0
    %203 = vmatprep.subr.mxu0 0.0
    %204 = vmatpush1.msra.mxu0 0.0
    %205 = vmatprep.subr.mxu0 0.0
    %206 = vmatpush1.msra.mxu0 0.0
    %207 = vmatprep.subr.mxu0 0.0
    %208 = vmatpush1.msra.mxu0 0.0
    %209 = vmatprep.subr.mxu0 0.0
    %210 = vmatpush1.msra.mxu0 0.0
    %211 = vmatprep.subr.mxu0 0.0
    %212 = vmatpush1.msra.mxu0 0.0
    %213 = vmatprep.subr.mxu0 0.0
    %214 = vmatpush1.msra.mxu0 0.0
    %215 = vmatprep.subr.mxu0 0.0
    %216 = vmatpush1.msra.mxu0 0.0
    %217 = vmatprep.subr.mxu0 0.0
    %218 = vmatpush1.msra.mxu0 0.0
    %219 = vmatprep.mubr.f32.mxu0 0.0
    %220 = vmatmul.mubr.f32.gmra.mrb[0].mxu0 %v153
    %v221 = vpop.f32.mrb[0].mxu0
    %v222 = vadd.f32 0.0, %v221
    %v223 = vpop.f32.mrb[0].mxu0
    %224 = vdwg.mxu0
    %v225 = vadd.f32 %v143, %v222
    %v226 = vmul.f32 %v225, 0.5
    %v227 = vtanh.pop %v226
    %v228 = vmul.f32 %v227, 0.5
    %v229 = vadd.f32 %v228, 0.5
    %v230 = vtanh.pop %v225
    %v231 = vmul.f32 %v229, 0.0
    %233 = vrot.lane.b32.xlu0 %v230, 64
    %v234 = vpop.permute.xlu0 %233
    %v236 = vmul.f32 %v229, %v234
    %238 = vrot.lane.b32.xlu0 %v236, 32
    %v239 = vpop.permute.xlu0 %238
    %v241 = vadd.f32 %v231, %v239
    %v242 = vtanh.pop %v241
    %244 = vrot.lane.b32.xlu0 %v242, 64
    %v245 = vpop.permute.xlu0 %244
    %v247 = vmul.f32 %v229, %v245
    %249 = vrot.lane.b32.xlu0 %v247, 32
    %v250 = vpop.permute.xlu0 %249
    %v251 = vsel %vm151, %v250, 0
    %253 = vmatprep.subr.mxu0 0.0
    %254 = vmatpush1.msra.mxu0 %v47
    %255 = vmatprep.subr.mxu0 0.0
    %256 = vmatpush1.msra.mxu0 %v48
    %257 = vmatprep.subr.mxu0 0.0
    %258 = vmatpush1.msra.mxu0 %v49
    %259 = vmatprep.subr.mxu0 0.0
    %260 = vmatpush1.msra.mxu0 %v50
    %261 = vmatprep.subr.mxu0 0.0
    %262 = vmatpush1.msra.mxu0 0.0
    %263 = vmatprep.subr.mxu0 0.0
    %264 = vmatpush1.msra.mxu0 0.0
    %265 = vmatprep.subr.mxu0 0.0
    %266 = vmatpush1.msra.mxu0 0.0
    %267 = vmatprep.subr.mxu0 0.0
    %268 = vmatpush1.msra.mxu0 0.0
    %269 = vmatprep.subr.mxu0 0.0
    %270 = vmatpush1.msra.mxu0 0.0
    %271 = vmatprep.subr.mxu0 0.0
    %272 = vmatpush1.msra.mxu0 0.0
    %273 = vmatprep.subr.mxu0 0.0
    %274 = vmatpush1.msra.mxu0 0.0
    %275 = vmatprep.subr.mxu0 0.0
    %276 = vmatpush1.msra.mxu0 0.0
    %277 = vmatprep.subr.mxu0 0.0
    %278 = vmatpush1.msra.mxu0 0.0
    %279 = vmatprep.subr.mxu0 0.0
    %280 = vmatpush1.msra.mxu0 0.0
    %281 = vmatprep.subr.mxu0 0.0
    %282 = vmatpush1.msra.mxu0 0.0
    %283 = vmatprep.subr.mxu0 0.0
    %284 = vmatpush1.msra.mxu0 0.0
    %285 = vmatprep.subr.mxu0 0.0
    %286 = vmatpush1.msra.mxu0 0.0
    %287 = vmatprep.subr.mxu0 0.0
    %288 = vmatpush1.msra.mxu0 0.0
    %289 = vmatprep.subr.mxu0 0.0
    %290 = vmatpush1.msra.mxu0 0.0
    %291 = vmatprep.subr.mxu0 0.0
    %292 = vmatpush1.msra.mxu0 0.0
    %293 = vmatprep.subr.mxu0 0.0
    %294 = vmatpush1.msra.mxu0 0.0
    %295 = vmatprep.subr.mxu0 0.0
    %296 = vmatpush1.msra.mxu0 0.0
    %297 = vmatprep.subr.mxu0 0.0
    %298 = vmatpush1.msra.mxu0 0.0
    %299 = vmatprep.subr.mxu0 0.0
    %300 = vmatpush1.msra.mxu0 0.0
    %301 = vmatprep.subr.mxu0 0.0
    %302 = vmatpush1.msra.mxu0 0.0
    %303 = vmatprep.subr.mxu0 0.0
    %304 = vmatpush1.msra.mxu0 0.0
    %305 = vmatprep.subr.mxu0 0.0
    %306 = vmatpush1.msra.mxu0 0.0
    %307 = vmatprep.subr.mxu0 0.0
    %308 = vmatpush1.msra.mxu0 0.0
    %309 = vmatprep.subr.mxu0 0.0
    %310 = vmatpush1.msra.mxu0 0.0
    %311 = vmatprep.subr.mxu0 0.0
    %312 = vmatpush1.msra.mxu0 0.0
    %313 = vmatprep.subr.mxu0 0.0
    %314 = vmatpush1.msra.mxu0 0.0
    %315 = vmatprep.subr.mxu0 0.0
    %316 = vmatpush1.msra.mxu0 0.0
    %317 = vmatprep.mubr.f32.mxu0 0.0
    %318 = vmatmul.mubr.f32.gmra.mrb[0].mxu0 %v251
    %v319 = vpop.f32.mrb[0].mxu0
    %v320 = vadd.f32 0.0, %v319
    %v321 = vpop.f32.mrb[0].mxu0
    %322 = vdwg.mxu0
    %v324 = vrot.slane %v320, 6
    %v326 = vadd.f32 %v143, %v324
    %v327 = vmul.f32 %v326, 0.5
    %v328 = vtanh.pop %v327
    %v329 = vmul.f32 %v328, 0.5
    %v330 = vadd.f32 %v329, 0.5
    %v331 = vtanh.pop %v326
    %v333 = vrot.slane %v241, 6
    %v335 = vmul.f32 %v330, %v333
    %337 = vrot.lane.b32.xlu0 %v331, 64
    %v338 = vpop.permute.xlu0 %337
    %v340 = vmul.f32 %v330, %v338
    %342 = vrot.lane.b32.xlu0 %v340, 32
    %v343 = vpop.permute.xlu0 %342
    %v345 = vadd.f32 %v335, %v343
    %v346 = vtanh.pop %v345
    %348 = vrot.lane.b32.xlu0 %v346, 64
    %v349 = vpop.permute.xlu0 %348
    %v351 = vmul.f32 %v330, %v349
    %v353 = vrot.slane %v351, 2
    %354 = vrot.lane.b32.xlu0 %v353, 32
    %v355 = vpop.permute.xlu0 %354
    %v356 = vsel %vm151, %v355, 0
    %358 = vmatprep.subr.mxu0 0.0
    %359 = vmatpush1.msra.mxu0 %v47
    %360 = vmatprep.subr.mxu0 0.0
    %361 = vmatpush1.msra.mxu0 %v48
    %362 = vmatprep.subr.mxu0 0.0
    %363 = vmatpush1.msra.mxu0 %v49
    %364 = vmatprep.subr.mxu0 0.0
    %365 = vmatpush1.msra.mxu0 %v50
    %366 = vmatprep.subr.mxu0 0.0
    %367 = vmatpush1.msra.mxu0 0.0
    %368 = vmatprep.subr.mxu0 0.0
    %369 = vmatpush1.msra.mxu0 0.0
    %370 = vmatprep.subr.mxu0 0.0
    %371 = vmatpush1.msra.mxu0 0.0
    %372 = vmatprep.subr.mxu0 0.0
    %373 = vmatpush1.msra.mxu0 0.0
    %374 = vmatprep.subr.mxu0 0.0
    %375 = vmatpush1.msra.mxu0 0.0
    %376 = vmatprep.subr.mxu0 0.0
    %377 = vmatpush1.msra.mxu0 0.0
    %378 = vmatprep.subr.mxu0 0.0
    %379 = vmatpush1.msra.mxu0 0.0
    %380 = vmatprep.subr.mxu0 0.0
    %381 = vmatpush1.msra.mxu0 0.0
    %382 = vmatprep.subr.mxu0 0.0
    %383 = vmatpush1.msra.mxu0 0.0
    %384 = vmatprep.subr.mxu0 0.0
    %385 = vmatpush1.msra.mxu0 0.0
    %386 = vmatprep.subr.mxu0 0.0
    %387 = vmatpush1.msra.mxu0 0.0
    %388 = vmatprep.subr.mxu0 0.0
    %389 = vmatpush1.msra.mxu0 0.0
    %390 = vmatprep.subr.mxu0 0.0
    %391 = vmatpush1.msra.mxu0 0.0
    %392 = vmatprep.subr.mxu0 0.0
    %393 = vmatpush1.msra.mxu0 0.0
    %394 = vmatprep.subr.mxu0 0.0
    %395 = vmatpush1.msra.mxu0 0.0
    %396 = vmatprep.subr.mxu0 0.0
    %397 = vmatpush1.msra.mxu0 0.0
    %398 = vmatprep.subr.mxu0 0.0
    %399 = vmatpush1.msra.mxu0 0.0
    %400 = vmatprep.subr.mxu0 0.0
    %401 = vmatpush1.msra.mxu0 0.0
    %402 = vmatprep.subr.mxu0 0.0
    %403 = vmatpush1.msra.mxu0 0.0
    %404 = vmatprep.subr.mxu0 0.0
    %405 = vmatpush1.msra.mxu0 0.0
    %406 = vmatprep.subr.mxu0 0.0
    %407 = vmatpush1.msra.mxu0 0.0
    %408 = vmatprep.subr.mxu0 0.0
    %409 = vmatpush1.msra.mxu0 0.0
    %410 = vmatprep.subr.mxu0 0.0
    %411 = vmatpush1.msra.mxu0 0.0
    %412 = vmatprep.subr.mxu0 0.0
    %413 = vmatpush1.msra.mxu0 0.0
    %414 = vmatprep.subr.mxu0 0.0
    %415 = vmatpush1.msra.mxu0 0.0
    %416 = vmatprep.subr.mxu0 0.0
    %417 = vmatpush1.msra.mxu0 0.0
    %418 = vmatprep.subr.mxu0 0.0
    %419 = vmatpush1.msra.mxu0 0.0
    %420 = vmatprep.subr.mxu0 0.0
    %421 = vmatpush1.msra.mxu0 0.0
    %422 = vmatprep.mubr.f32.mxu0 0.0
    %423 = vmatmul.mubr.f32.gmra.mrb[0].mxu0 %v356
    %v424 = vpop.f32.mrb[0].mxu0
    %v425 = vadd.f32 0.0, %v424
    %v426 = vpop.f32.mrb[0].mxu0
    %427 = vdwg.mxu0
    %v429 = vrot.slane %v425, 4
    %v431 = vadd.f32 %v143, %v429
    %v432 = vmul.f32 %v431, 0.5
    %v433 = vtanh.pop %v432
    %v434 = vmul.f32 %v433, 0.5
    %v435 = vadd.f32 %v434, 0.5
    %v436 = vtanh.pop %v431
    %v438 = vrot.slane %v345, 6
    %v440 = vmul.f32 %v435, %v438
    %442 = vrot.lane.b32.xlu0 %v436, 64
    %v443 = vpop.permute.xlu0 %442
    %v445 = vmul.f32 %v435, %v443
    %447 = vrot.lane.b32.xlu0 %v445, 32
    %v448 = vpop.permute.xlu0 %447
    %v450 = vadd.f32 %v440, %v448
    %v451 = vtanh.pop %v450
    %453 = vrot.lane.b32.xlu0 %v451, 64
    %v454 = vpop.permute.xlu0 %453
    %v456 = vmul.f32 %v435, %v454
    %v458 = vrot.slane %v456, 4
    %459 = vrot.lane.b32.xlu0 %v458, 32
    %v460 = vpop.permute.xlu0 %459
    %v461 = vsel %vm151, %v460, 0
    %463 = vmatprep.subr.mxu0 0.0
    %464 = vmatpush1.msra.mxu0 %v47
    %465 = vmatprep.subr.mxu0 0.0
    %466 = vmatpush1.msra.mxu0 %v48
    %467 = vmatprep.subr.mxu0 0.0
    %468 = vmatpush1.msra.mxu0 %v49
    %469 = vmatprep.subr.mxu0 0.0
    %470 = vmatpush1.msra.mxu0 %v50
    %471 = vmatprep.subr.mxu0 0.0
    %472 = vmatpush1.msra.mxu0 0.0
    %473 = vmatprep.subr.mxu0 0.0
    %474 = vmatpush1.msra.mxu0 0.0
    %475 = vmatprep.subr.mxu0 0.0
    %476 = vmatpush1.msra.mxu0 0.0
    %477 = vmatprep.subr.mxu0 0.0
    %478 = vmatpush1.msra.mxu0 0.0
    %479 = vmatprep.subr.mxu0 0.0
    %480 = vmatpush1.msra.mxu0 0.0
    %481 = vmatprep.subr.mxu0 0.0
    %482 = vmatpush1.msra.mxu0 0.0
    %483 = vmatprep.subr.mxu0 0.0
    %484 = vmatpush1.msra.mxu0 0.0
    %485 = vmatprep.subr.mxu0 0.0
    %486 = vmatpush1.msra.mxu0 0.0
    %487 = vmatprep.subr.mxu0 0.0
    %488 = vmatpush1.msra.mxu0 0.0
    %489 = vmatprep.subr.mxu0 0.0
    %490 = vmatpush1.msra.mxu0 0.0
    %491 = vmatprep.subr.mxu0 0.0
    %492 = vmatpush1.msra.mxu0 0.0
    %493 = vmatprep.subr.mxu0 0.0
    %494 = vmatpush1.msra.mxu0 0.0
    %495 = vmatprep.subr.mxu0 0.0
    %496 = vmatpush1.msra.mxu0 0.0
    %497 = vmatprep.subr.mxu0 0.0
    %498 = vmatpush1.msra.mxu0 0.0
    %499 = vmatprep.subr.mxu0 0.0
    %500 = vmatpush1.msra.mxu0 0.0
    %501 = vmatprep.subr.mxu0 0.0
    %502 = vmatpush1.msra.mxu0 0.0
    %503 = vmatprep.subr.mxu0 0.0
    %504 = vmatpush1.msra.mxu0 0.0
    %505 = vmatprep.subr.mxu0 0.0
    %506 = vmatpush1.msra.mxu0 0.0
    %507 = vmatprep.subr.mxu0 0.0
    %508 = vmatpush1.msra.mxu0 0.0
    %509 = vmatprep.subr.mxu0 0.0
    %510 = vmatpush1.msra.mxu0 0.0
    %511 = vmatprep.subr.mxu0 0.0
    %512 = vmatpush1.msra.mxu0 0.0
    %513 = vmatprep.subr.mxu0 0.0
    %514 = vmatpush1.msra.mxu0 0.0
    %515 = vmatprep.subr.mxu0 0.0
    %516 = vmatpush1.msra.mxu0 0.0
    %517 = vmatprep.subr.mxu0 0.0
    %518 = vmatpush1.msra.mxu0 0.0
    %519 = vmatprep.subr.mxu0 0.0
    %520 = vmatpush1.msra.mxu0 0.0
    %521 = vmatprep.subr.mxu0 0.0
    %522 = vmatpush1.msra.mxu0 0.0
    %523 = vmatprep.subr.mxu0 0.0
    %524 = vmatpush1.msra.mxu0 0.0
    %525 = vmatprep.subr.mxu0 0.0
    %526 = vmatpush1.msra.mxu0 0.0
    %527 = vmatprep.mubr.f32.mxu0 0.0
    %528 = vmatmul.mubr.f32.gmra.mrb[0].mxu0 %v461
    %v529 = vpop.f32.mrb[0].mxu0
    %v530 = vadd.f32 0.0, %v529
    %v531 = vpop.f32.mrb[0].mxu0
    %532 = vdwg.mxu0
    %v534 = vrot.slane %v530, 2
    %v536 = vadd.f32 %v143, %v534
    %v537 = vmul.f32 %v536, 0.5
    %v538 = vtanh.pop %v537
    %v539 = vmul.f32 %v538, 0.5
    %v540 = vadd.f32 %v539, 0.5
    %v541 = vtanh.pop %v536
    %v543 = vrot.slane %v450, 6
    %v545 = vmul.f32 %v540, %v543
    %547 = vrot.lane.b32.xlu0 %v541, 64
    %v548 = vpop.permute.xlu0 %547
    %v550 = vmul.f32 %v540, %v548
    %552 = vrot.lane.b32.xlu0 %v550, 32
    %v553 = vpop.permute.xlu0 %552
    %v555 = vadd.f32 %v545, %v553
    %v556 = vtanh.pop %v555
    %558 = vrot.lane.b32.xlu0 %v556, 64
    %v559 = vpop.permute.xlu0 %558
    %v561 = vmul.f32 %v540, %v559
    %v563 = vrot.slane %v561, 6
    %564 = vrot.lane.b32.xlu0 %v563, 32
    %v565 = vpop.permute.xlu0 %564
    %v566 = vsel %vm151, %v565, 0
    %568 = vmatprep.subr.mxu0 0.0
    %569 = vmatpush1.msra.mxu0 %v47
    %570 = vmatprep.subr.mxu0 0.0
    %571 = vmatpush1.msra.mxu0 %v48
    %572 = vmatprep.subr.mxu0 0.0
    %573 = vmatpush1.msra.mxu0 %v49
    %574 = vmatprep.subr.mxu0 0.0
    %575 = vmatpush1.msra.mxu0 %v50
    %576 = vmatprep.subr.mxu0 0.0
    %577 = vmatpush1.msra.mxu0 0.0
    %578 = vmatprep.subr.mxu0 0.0
    %579 = vmatpush1.msra.mxu0 0.0
    %580 = vmatprep.subr.mxu0 0.0
    %581 = vmatpush1.msra.mxu0 0.0
    %582 = vmatprep.subr.mxu0 0.0
    %583 = vmatpush1.msra.mxu0 0.0
    %584 = vmatprep.subr.mxu0 0.0
    %585 = vmatpush1.msra.mxu0 0.0
    %586 = vmatprep.subr.mxu0 0.0
    %587 = vmatpush1.msra.mxu0 0.0
    %588 = vmatprep.subr.mxu0 0.0
    %589 = vmatpush1.msra.mxu0 0.0
    %590 = vmatprep.subr.mxu0 0.0
    %591 = vmatpush1.msra.mxu0 0.0
    %592 = vmatprep.subr.mxu0 0.0
    %593 = vmatpush1.msra.mxu0 0.0
    %594 = vmatprep.subr.mxu0 0.0
    %595 = vmatpush1.msra.mxu0 0.0
    %596 = vmatprep.subr.mxu0 0.0
    %597 = vmatpush1.msra.mxu0 0.0
    %598 = vmatprep.subr.mxu0 0.0
    %599 = vmatpush1.msra.mxu0 0.0
    %600 = vmatprep.subr.mxu0 0.0
    %601 = vmatpush1.msra.mxu0 0.0
    %602 = vmatprep.subr.mxu0 0.0
    %603 = vmatpush1.msra.mxu0 0.0
    %604 = vmatprep.subr.mxu0 0.0
    %605 = vmatpush1.msra.mxu0 0.0
    %606 = vmatprep.subr.mxu0 0.0
    %607 = vmatpush1.msra.mxu0 0.0
    %608 = vmatprep.subr.mxu0 0.0
    %609 = vmatpush1.msra.mxu0 0.0
    %610 = vmatprep.subr.mxu0 0.0
    %611 = vmatpush1.msra.mxu0 0.0
    %612 = vmatprep.subr.mxu0 0.0
    %613 = vmatpush1.msra.mxu0 0.0
    %614 = vmatprep.subr.mxu0 0.0
    %615 = vmatpush1.msra.mxu0 0.0
    %616 = vmatprep.subr.mxu0 0.0
    %617 = vmatpush1.msra.mxu0 0.0
    %618 = vmatprep.subr.mxu0 0.0
    %619 = vmatpush1.msra.mxu0 0.0
    %620 = vmatprep.subr.mxu0 0.0
    %621 = vmatpush1.msra.mxu0 0.0
    %622 = vmatprep.subr.mxu0 0.0
    %623 = vmatpush1.msra.mxu0 0.0
    %624 = vmatprep.subr.mxu0 0.0
    %625 = vmatpush1.msra.mxu0 0.0
    %626 = vmatprep.subr.mxu0 0.0
    %627 = vmatpush1.msra.mxu0 0.0
    %628 = vmatprep.subr.mxu0 0.0
    %629 = vmatpush1.msra.mxu0 0.0
    %630 = vmatprep.subr.mxu0 0.0
    %631 = vmatpush1.msra.mxu0 0.0
    %632 = vmatprep.mubr.f32.mxu0 0.0
    %633 = vmatmul.mubr.f32.gmra.mrb[0].mxu0 %v566
    %v634 = vpop.f32.mrb[0].mxu0
    %v635 = vadd.f32 0.0, %v634
    %v636 = vpop.f32.mrb[0].mxu0
    %637 = vdwg.mxu0
    %v638 = vadd.f32 %v148, %v635
    %v639 = vmul.f32 %v638, 0.5
    %v640 = vtanh.pop %v639
    %v641 = vmul.f32 %v640, 0.5
    %v642 = vadd.f32 %v641, 0.5
    %v643 = vtanh.pop %v638
    %v645 = vrot.slane %v555, 6
    %v647 = vmul.f32 %v642, %v645
    %649 = vrot.lane.b32.xlu0 %v643, 64
    %v650 = vpop.permute.xlu0 %649
    %v652 = vmul.f32 %v642, %v650
    %654 = vrot.lane.b32.xlu0 %v652, 32
    %v655 = vpop.permute.xlu0 %654
    %v657 = vadd.f32 %v647, %v655
    %v658 = vtanh.pop %v657
    %660 = vrot.lane.b32.xlu0 %v658, 64
    %v661 = vpop.permute.xlu0 %660
    %v663 = vmul.f32 %v642, %v661
    %665 = vrot.lane.b32.xlu0 %v663, 32
    %v666 = vpop.permute.xlu0 %665
    %v667 = vsel %vm151, %v666, 0
    %669 = vmatprep.subr.mxu0 0.0
    %670 = vmatpush1.msra.mxu0 %v47
    %671 = vmatprep.subr.mxu0 0.0
    %672 = vmatpush1.msra.mxu0 %v48
    %673 = vmatprep.subr.mxu0 0.0
    %674 = vmatpush1.msra.mxu0 %v49
    %675 = vmatprep.subr.mxu0 0.0
    %676 = vmatpush1.msra.mxu0 %v50
    %677 = vmatprep.subr.mxu0 0.0
    %678 = vmatpush1.msra.mxu0 0.0
    %679 = vmatprep.subr.mxu0 0.0
    %680 = vmatpush1.msra.mxu0 0.0
    %681 = vmatprep.subr.mxu0 0.0
    %682 = vmatpush1.msra.mxu0 0.0
    %683 = vmatprep.subr.mxu0 0.0
    %684 = vmatpush1.msra.mxu0 0.0
    %685 = vmatprep.subr.mxu0 0.0
    %686 = vmatpush1.msra.mxu0 0.0
    %687 = vmatprep.subr.mxu0 0.0
    %688 = vmatpush1.msra.mxu0 0.0
    %689 = vmatprep.subr.mxu0 0.0
    %690 = vmatpush1.msra.mxu0 0.0
    %691 = vmatprep.subr.mxu0 0.0
    %692 = vmatpush1.msra.mxu0 0.0
    %693 = vmatprep.subr.mxu0 0.0
    %694 = vmatpush1.msra.mxu0 0.0
    %695 = vmatprep.subr.mxu0 0.0
    %696 = vmatpush1.msra.mxu0 0.0
    %697 = vmatprep.subr.mxu0 0.0
    %698 = vmatpush1.msra.mxu0 0.0
    %699 = vmatprep.subr.mxu0 0.0
    %700 = vmatpush1.msra.mxu0 0.0
    %701 = vmatprep.subr.mxu0 0.0
    %702 = vmatpush1.msra.mxu0 0.0
    %703 = vmatprep.subr.mxu0 0.0
    %704 = vmatpush1.msra.mxu0 0.0
    %705 = vmatprep.subr.mxu0 0.0
    %706 = vmatpush1.msra.mxu0 0.0
    %707 = vmatprep.subr.mxu0 0.0
    %708 = vmatpush1.msra.mxu0 0.0
    %709 = vmatprep.subr.mxu0 0.0
    %710 = vmatpush1.msra.mxu0 0.0
    %711 = vmatprep.subr.mxu0 0.0
    %712 = vmatpush1.msra.mxu0 0.0
    %713 = vmatprep.subr.mxu0 0.0
    %714 = vmatpush1.msra.mxu0 0.0
    %715 = vmatprep.subr.mxu0 0.0
    %716 = vmatpush1.msra.mxu0 0.0
    %717 = vmatprep.subr.mxu0 0.0
    %718 = vmatpush1.msra.mxu0 0.0
    %719 = vmatprep.subr.mxu0 0.0
    %720 = vmatpush1.msra.mxu0 0.0
    %721 = vmatprep.subr.mxu0 0.0
    %722 = vmatpush1.msra.mxu0 0.0
    %723 = vmatprep.subr.mxu0 0.0
    %724 = vmatpush1.msra.mxu0 0.0
    %725 = vmatprep.subr.mxu0 0.0
    %726 = vmatpush1.msra.mxu0 0.0
    %727 = vmatprep.subr.mxu0 0.0
    %728 = vmatpush1.msra.mxu0 0.0
    %729 = vmatprep.subr.mxu0 0.0
    %730 = vmatpush1.msra.mxu0 0.0
    %731 = vmatprep.subr.mxu0 0.0
    %732 = vmatpush1.msra.mxu0 0.0
    %733 = vmatprep.mubr.f32.mxu0 0.0
    %734 = vmatmul.mubr.f32.gmra.mrb[0].mxu0 %v667
    %v735 = vpop.f32.mrb[0].mxu0
    %v736 = vadd.f32 0.0, %v735
    %v737 = vpop.f32.mrb[0].mxu0
    %738 = vdwg.mxu0
    %v740 = vrot.slane %v736, 6
    %v742 = vadd.f32 %v148, %v740
    %v743 = vmul.f32 %v742, 0.5
    %v744 = vtanh.pop %v743
    %v745 = vmul.f32 %v744, 0.5
    %v746 = vadd.f32 %v745, 0.5
    %v747 = vtanh.pop %v742
    %v749 = vrot.slane %v657, 6
    %v751 = vmul.f32 %v746, %v749
    %753 = vrot.lane.b32.xlu0 %v747, 64
    %v754 = vpop.permute.xlu0 %753
    %v756 = vmul.f32 %v746, %v754
    %758 = vrot.lane.b32.xlu0 %v756, 32
    %v759 = vpop.permute.xlu0 %758
    %v761 = vadd.f32 %v751, %v759
    %v762 = vtanh.pop %v761
    %764 = vrot.lane.b32.xlu0 %v762, 64
    %v765 = vpop.permute.xlu0 %764
    %v767 = vmul.f32 %v746, %v765
    %v769 = vrot.slane %v767, 2
    %770 = vrot.lane.b32.xlu0 %v769, 32
    %v771 = vpop.permute.xlu0 %770
    %v772 = vsel %vm151, %v771, 0
    %774 = vmatprep.subr.mxu0 0.0
    %775 = vmatpush1.msra.mxu0 %v47
    %776 = vmatprep.subr.mxu0 0.0
    %777 = vmatpush1.msra.mxu0 %v48
    %778 = vmatprep.subr.mxu0 0.0
    %779 = vmatpush1.msra.mxu0 %v49
    %780 = vmatprep.subr.mxu0 0.0
    %781 = vmatpush1.msra.mxu0 %v50
    %782 = vmatprep.subr.mxu0 0.0
    %783 = vmatpush1.msra.mxu0 0.0
    %784 = vmatprep.subr.mxu0 0.0
    %785 = vmatpush1.msra.mxu0 0.0
    %786 = vmatprep.subr.mxu0 0.0
    %787 = vmatpush1.msra.mxu0 0.0
    %788 = vmatprep.subr.mxu0 0.0
    %789 = vmatpush1.msra.mxu0 0.0
    %790 = vmatprep.subr.mxu0 0.0
    %791 = vmatpush1.msra.mxu0 0.0
    %792 = vmatprep.subr.mxu0 0.0
    %793 = vmatpush1.msra.mxu0 0.0
    %794 = vmatprep.subr.mxu0 0.0
    %795 = vmatpush1.msra.mxu0 0.0
    %796 = vmatprep.subr.mxu0 0.0
    %797 = vmatpush1.msra.mxu0 0.0
    %798 = vmatprep.subr.mxu0 0.0
    %799 = vmatpush1.msra.mxu0 0.0
    %800 = vmatprep.subr.mxu0 0.0
    %801 = vmatpush1.msra.mxu0 0.0
    %802 = vmatprep.subr.mxu0 0.0
    %803 = vmatpush1.msra.mxu0 0.0
    %804 = vmatprep.subr.mxu0 0.0
    %805 = vmatpush1.msra.mxu0 0.0
    %806 = vmatprep.subr.mxu0 0.0
    %807 = vmatpush1.msra.mxu0 0.0
    %808 = vmatprep.subr.mxu0 0.0
    %809 = vmatpush1.msra.mxu0 0.0
    %810 = vmatprep.subr.mxu0 0.0
    %811 = vmatpush1.msra.mxu0 0.0
    %812 = vmatprep.subr.mxu0 0.0
    %813 = vmatpush1.msra.mxu0 0.0
    %814 = vmatprep.subr.mxu0 0.0
    %815 = vmatpush1.msra.mxu0 0.0
    %816 = vmatprep.subr.mxu0 0.0
    %817 = vmatpush1.msra.mxu0 0.0
    %818 = vmatprep.subr.mxu0 0.0
    %819 = vmatpush1.msra.mxu0 0.0
    %820 = vmatprep.subr.mxu0 0.0
    %821 = vmatpush1.msra.mxu0 0.0
    %822 = vmatprep.subr.mxu0 0.0
    %823 = vmatpush1.msra.mxu0 0.0
    %824 = vmatprep.subr.mxu0 0.0
    %825 = vmatpush1.msra.mxu0 0.0
    %826 = vmatprep.subr.mxu0 0.0
    %827 = vmatpush1.msra.mxu0 0.0
    %828 = vmatprep.subr.mxu0 0.0
    %829 = vmatpush1.msra.mxu0 0.0
    %830 = vmatprep.subr.mxu0 0.0
    %831 = vmatpush1.msra.mxu0 0.0
    %832 = vmatprep.subr.mxu0 0.0
    %833 = vmatpush1.msra.mxu0 0.0
    %834 = vmatprep.subr.mxu0 0.0
    %835 = vmatpush1.msra.mxu0 0.0
    %836 = vmatprep.subr.mxu0 0.0
    %837 = vmatpush1.msra.mxu0 0.0
    %838 = vmatprep.mubr.f32.mxu0 0.0
    %839 = vmatmul.mubr.f32.gmra.mrb[0].mxu0 %v772
    %v840 = vpop.f32.mrb[0].mxu0
    %v841 = vadd.f32 0.0, %v840
    %v842 = vpop.f32.mrb[0].mxu0
    %843 = vdwg.mxu0
    %v845 = vrot.slane %v841, 4
    %v847 = vadd.f32 %v148, %v845
    %v848 = vmul.f32 %v847, 0.5
    %v849 = vtanh.pop %v848
    %v850 = vmul.f32 %v849, 0.5
    %v851 = vadd.f32 %v850, 0.5
    %v852 = vtanh.pop %v847
    %v854 = vrot.slane %v761, 6
    %v856 = vmul.f32 %v851, %v854
    %858 = vrot.lane.b32.xlu0 %v852, 64
    %v859 = vpop.permute.xlu0 %858
    %v861 = vmul.f32 %v851, %v859
    %863 = vrot.lane.b32.xlu0 %v861, 32
    %v864 = vpop.permute.xlu0 %863
    %v866 = vadd.f32 %v856, %v864
    %v867 = vtanh.pop %v866
    %869 = vrot.lane.b32.xlu0 %v867, 64
    %v870 = vpop.permute.xlu0 %869
    %v872 = vmul.f32 %v851, %v870
    %v874 = vrot.slane %v872, 4
    %875 = vrot.lane.b32.xlu0 %v874, 32
    %v876 = vpop.permute.xlu0 %875
    %v877 = vsel %vm151, %v876, 0
    %879 = vmatprep.subr.mxu0 0.0
    %880 = vmatpush1.msra.mxu0 %v47
    %881 = vmatprep.subr.mxu0 0.0
    %882 = vmatpush1.msra.mxu0 %v48
    %883 = vmatprep.subr.mxu0 0.0
    %884 = vmatpush1.msra.mxu0 %v49
    %885 = vmatprep.subr.mxu0 0.0
    %886 = vmatpush1.msra.mxu0 %v50
    %887 = vmatprep.subr.mxu0 0.0
    %888 = vmatpush1.msra.mxu0 0.0
    %889 = vmatprep.subr.mxu0 0.0
    %890 = vmatpush1.msra.mxu0 0.0
    %891 = vmatprep.subr.mxu0 0.0
    %892 = vmatpush1.msra.mxu0 0.0
    %893 = vmatprep.subr.mxu0 0.0
    %894 = vmatpush1.msra.mxu0 0.0
    %895 = vmatprep.subr.mxu0 0.0
    %896 = vmatpush1.msra.mxu0 0.0
    %897 = vmatprep.subr.mxu0 0.0
    %898 = vmatpush1.msra.mxu0 0.0
    %899 = vmatprep.subr.mxu0 0.0
    %900 = vmatpush1.msra.mxu0 0.0
    %901 = vmatprep.subr.mxu0 0.0
    %902 = vmatpush1.msra.mxu0 0.0
    %903 = vmatprep.subr.mxu0 0.0
    %904 = vmatpush1.msra.mxu0 0.0
    %905 = vmatprep.subr.mxu0 0.0
    %906 = vmatpush1.msra.mxu0 0.0
    %907 = vmatprep.subr.mxu0 0.0
    %908 = vmatpush1.msra.mxu0 0.0
    %909 = vmatprep.subr.mxu0 0.0
    %910 = vmatpush1.msra.mxu0 0.0
    %911 = vmatprep.subr.mxu0 0.0
    %912 = vmatpush1.msra.mxu0 0.0
    %913 = vmatprep.subr.mxu0 0.0
    %914 = vmatpush1.msra.mxu0 0.0
    %915 = vmatprep.subr.mxu0 0.0
    %916 = vmatpush1.msra.mxu0 0.0
    %917 = vmatprep.subr.mxu0 0.0
    %918 = vmatpush1.msra.mxu0 0.0
    %919 = vmatprep.subr.mxu0 0.0
    %920 = vmatpush1.msra.mxu0 0.0
    %921 = vmatprep.subr.mxu0 0.0
    %922 = vmatpush1.msra.mxu0 0.0
    %923 = vmatprep.subr.mxu0 0.0
    %924 = vmatpush1.msra.mxu0 0.0
    %925 = vmatprep.subr.mxu0 0.0
    %926 = vmatpush1.msra.mxu0 0.0
    %927 = vmatprep.subr.mxu0 0.0
    %928 = vmatpush1.msra.mxu0 0.0
    %929 = vmatprep.subr.mxu0 0.0
    %930 = vmatpush1.msra.mxu0 0.0
    %931 = vmatprep.subr.mxu0 0.0
    %932 = vmatpush1.msra.mxu0 0.0
    %933 = vmatprep.subr.mxu0 0.0
    %934 = vmatpush1.msra.mxu0 0.0
    %935 = vmatprep.subr.mxu0 0.0
    %936 = vmatpush1.msra.mxu0 0.0
    %937 = vmatprep.subr.mxu0 0.0
    %938 = vmatpush1.msra.mxu0 0.0
    %939 = vmatprep.subr.mxu0 0.0
    %940 = vmatpush1.msra.mxu0 0.0
    %941 = vmatprep.subr.mxu0 0.0
    %942 = vmatpush1.msra.mxu0 0.0
    %943 = vmatprep.mubr.f32.mxu0 0.0
    %944 = vmatmul.mubr.f32.gmra.mrb[0].mxu0 %v877
    %v945 = vpop.f32.mrb[0].mxu0
    %v946 = vadd.f32 0.0, %v945
    %v947 = vpop.f32.mrb[0].mxu0
    %948 = vdwg.mxu0
    %v950 = vrot.slane %v946, 2
    %v952 = vadd.f32 %v148, %v950
    %v953 = vmul.f32 %v952, 0.5
    %v954 = vtanh.pop %v953
    %v955 = vmul.f32 %v954, 0.5
    %v956 = vadd.f32 %v955, 0.5
    %v957 = vtanh.pop %v952
    %v959 = vrot.slane %v866, 6
    %v961 = vmul.f32 %v956, %v959
    %963 = vrot.lane.b32.xlu0 %v957, 64
    %v964 = vpop.permute.xlu0 %963
    %v966 = vmul.f32 %v956, %v964
    %968 = vrot.lane.b32.xlu0 %v966, 32
    %v969 = vpop.permute.xlu0 %968
    %v971 = vadd.f32 %v961, %v969
    %v972 = vtanh.pop %v971
    %974 = vrot.lane.b32.xlu0 %v972, 64
    %v975 = vpop.permute.xlu0 %974
    %v977 = vmul.f32 %v956, %v975
    %vm978 = vcmask 1041408
    %v979 = vsel %vm978, %v247, %v351
    %v980 = vsel %vm72, %v979, %v456
    %vm981 = vcmask 1045504
    %v982 = vsel %vm981, %v980, %v561
    %v983 = vsel %vm978, %v663, %v767
    %v984 = vsel %vm72, %v983, %v872
    %v985 = vsel %vm981, %v984, %v977
    %v986 = vld [vmem:[%s4] sm:$0xff]
    %v987 = vld [vmem:[%s4 + $0x8] sm:$0xff]
    %v988 = vld [vmem:[%s4 + $0x10] sm:$0xff]
    %v989 = vld [vmem:[%s4 + $0x18] sm:$0xff]
    %v990 = vld [vmem:[%s6] sm:$0x1]
    %v992 = vlaneseq
    %v993 = vshrl.u32 %v992, 7
    %v994 = vsub.s32 0, %v993
    %v995 = vrot.slane %v990, %v994
    %999 = vrot.lane.b32.xlu0 %v982, 32
    %v1000 = vpop.permute.xlu0 %999
    %1001 = vrot.lane.b32.xlu0 %v985, 32
    %v1002 = vpop.permute.xlu0 %1001
    %v1003 = vsel %vm151, %v1000, 0
    %v1005 = vsel %vm151, %v1002, 0
    %1007 = vmatprep.subr.mxu0 0.0
    %1008 = vmatpush1.msra.mxu0 %v986
    %1009 = vmatprep.subr.mxu0 0.0
    %1010 = vmatpush1.msra.mxu0 %v987
    %1011 = vmatprep.subr.mxu0 0.0
    %1012 = vmatpush1.msra.mxu0 %v988
    %1013 = vmatprep.subr.mxu0 0.0
    %1014 = vmatpush1.msra.mxu0 %v989
    %1015 = vmatprep.subr.mxu0 0.0
    %1016 = vmatpush1.msra.mxu0 0.0
    %1017 = vmatprep.subr.mxu0 0.0
    %1018 = vmatpush1.msra.mxu0 0.0
    %1019 = vmatprep.subr.mxu0 0.0
    %1020 = vmatpush1.msra.mxu0 0.0
    %1021 = vmatprep.subr.mxu0 0.0
    %1022 = vmatpush1.msra.mxu0 0.0
    %1023 = vmatprep.subr.mxu0 0.0
    %1024 = vmatpush1.msra.mxu0 0.0
    %1025 = vmatprep.subr.mxu0 0.0
    %1026 = vmatpush1.msra.mxu0 0.0
    %1027 = vmatprep.subr.mxu0 0.0
    %1028 = vmatpush1.msra.mxu0 0.0
    %1029 = vmatprep.subr.mxu0 0.0
    %1030 = vmatpush1.msra.mxu0 0.0
    %1031 = vmatprep.subr.mxu0 0.0
    %1032 = vmatpush1.msra.mxu0 0.0
    %1033 = vmatprep.subr.mxu0 0.0
    %1034 = vmatpush1.msra.mxu0 0.0
    %1035 = vmatprep.subr.mxu0 0.0
    %1036 = vmatpush1.msra.mxu0 0.0
    %1037 = vmatprep.subr.mxu0 0.0
    %1038 = vmatpush1.msra.mxu0 0.0
    %1039 = vmatprep.subr.mxu0 0.0
    %1040 = vmatpush1.msra.mxu0 0.0
    %1041 = vmatprep.subr.mxu0 0.0
    %1042 = vmatpush1.msra.mxu0 0.0
    %1043 = vmatprep.subr.mxu0 0.0
    %1044 = vmatpush1.msra.mxu0 0.0
    %1045 = vmatprep.subr.mxu0 0.0
    %1046 = vmatpush1.msra.mxu0 0.0
    %1047 = vmatprep.subr.mxu0 0.0
    %1048 = vmatpush1.msra.mxu0 0.0
    %1049 = vmatprep.subr.mxu0 0.0
    %1050 = vmatpush1.msra.mxu0 0.0
    %1051 = vmatprep.subr.mxu0 0.0
    %1052 = vmatpush1.msra.mxu0 0.0
    %1053 = vmatprep.subr.mxu0 0.0
    %1054 = vmatpush1.msra.mxu0 0.0
    %1055 = vmatprep.subr.mxu0 0.0
    %1056 = vmatpush1.msra.mxu0 0.0
    %1057 = vmatprep.subr.mxu0 0.0
    %1058 = vmatpush1.msra.mxu0 0.0
    %1059 = vmatprep.subr.mxu0 0.0
    %1060 = vmatpush1.msra.mxu0 0.0
    %1061 = vmatprep.subr.mxu0 0.0
    %1062 = vmatpush1.msra.mxu0 0.0
    %1063 = vmatprep.subr.mxu0 0.0
    %1064 = vmatpush1.msra.mxu0 0.0
    %1065 = vmatprep.subr.mxu0 0.0
    %1066 = vmatpush1.msra.mxu0 0.0
    %1067 = vmatprep.subr.mxu0 0.0
    %1068 = vmatpush1.msra.mxu0 0.0
    %1069 = vmatprep.subr.mxu0 0.0
    %1070 = vmatpush1.msra.mxu0 0.0
    %1071 = vmatprep.mubr.f32.mxu0 0.0
    %1072 = vmatmul.mubr.f32.gmra.mrb[0].mxu0 %v1003
    %v1073 = vpop.f32.mrb[0].mxu0
    %v1074 = vadd.f32 %v995, %v1073
    %v1075 = vpop.f32.mrb[0].mxu0
    %1076 = vmatprep.mubr.f32.mxu0 0.0
    %1077 = vmatmul.mubr.f32.gmra.mrb[0].mxu0 %v1005
    %v1078 = vpop.f32.mrb[0].mxu0
    %v1079 = vadd.f32 %v995, %v1078
    %v1080 = vpop.f32.mrb[0].mxu0
    %1081 = vdwg.mxu0
    %1082 = vmatprep.subr.mxu0 0.0
    %1083 = vmatpush1.msra.mxu0 %v51
    %1084 = vmatprep.subr.mxu0 0.0
    %1085 = vmatpush1.msra.mxu0 %v52
    %1086 = vmatprep.subr.mxu0 0.0
    %1087 = vmatpush1.msra.mxu0 %v53
    %1088 = vmatprep.subr.mxu0 0.0
    %1089 = vmatpush1.msra.mxu0 %v54
    %1090 = vmatprep.subr.mxu0 0.0
    %1091 = vmatpush1.msra.mxu0 0.0
    %1092 = vmatprep.subr.mxu0 0.0
    %1093 = vmatpush1.msra.mxu0 0.0
    %1094 = vmatprep.subr.mxu0 0.0
    %1095 = vmatpush1.msra.mxu0 0.0
    %1096 = vmatprep.subr.mxu0 0.0
    %1097 = vmatpush1.msra.mxu0 0.0
    %1098 = vmatprep.subr.mxu0 0.0
    %1099 = vmatpush1.msra.mxu0 0.0
    %1100 = vmatprep.subr.mxu0 0.0
    %1101 = vmatpush1.msra.mxu0 0.0
    %1102 = vmatprep.subr.mxu0 0.0
    %1103 = vmatpush1.msra.mxu0 0.0
    %1104 = vmatprep.subr.mxu0 0.0
    %1105 = vmatpush1.msra.mxu0 0.0
    %1106 = vmatprep.subr.mxu0 0.0
    %1107 = vmatpush1.msra.mxu0 0.0
    %1108 = vmatprep.subr.mxu0 0.0
    %1109 = vmatpush1.msra.mxu0 0.0
    %1110 = vmatprep.subr.mxu0 0.0
    %1111 = vmatpush1.msra.mxu0 0.0
    %1112 = vmatprep.subr.mxu0 0.0
    %1113 = vmatpush1.msra.mxu0 0.0
    %1114 = vmatprep.subr.mxu0 0.0
    %1115 = vmatpush1.msra.mxu0 0.0
    %1116 = vmatprep.subr.mxu0 0.0
    %1117 = vmatpush1.msra.mxu0 0.0
    %1118 = vmatprep.subr.mxu0 0.0
    %1119 = vmatpush1.msra.mxu0 0.0
    %1120 = vmatprep.subr.mxu0 0.0
    %1121 = vmatpush1.msra.mxu0 0.0
    %1122 = vmatprep.subr.mxu0 0.0
    %1123 = vmatpush1.msra.mxu0 0.0
    %1124 = vmatprep.subr.mxu0 0.0
    %1125 = vmatpush1.msra.mxu0 0.0
    %1126 = vmatprep.subr.mxu0 0.0
    %1127 = vmatpush1.msra.mxu0 0.0
    %1128 = vmatprep.subr.mxu0 0.0
    %1129 = vmatpush1.msra.mxu0 0.0
    %1130 = vmatprep.subr.mxu0 0.0
    %1131 = vmatpush1.msra.mxu0 0.0
    %1132 = vmatprep.subr.mxu0 0.0
    %1133 = vmatpush1.msra.mxu0 0.0
    %1134 = vmatprep.subr.mxu0 0.0
    %1135 = vmatpush1.msra.mxu0 0.0
    %1136 = vmatprep.subr.mxu0 0.0
    %1137 = vmatpush1.msra.mxu0 0.0
    %1138 = vmatprep.subr.mxu0 0.0
    %1139 = vmatpush1.msra.mxu0 0.0
    %1140 = vmatprep.subr.mxu0 0.0
    %1141 = vmatpush1.msra.mxu0 0.0
    %1142 = vmatprep.subr.mxu0 0.0
    %1143 = vmatpush1.msra.mxu0 0.0
    %1144 = vmatprep.subr.mxu0 0.0
    %1145 = vmatpush1.msra.mxu0 0.0
    %1146 = vmatprep.mubr.f32.mxu0 0.0
    %1147 = vmatmul.mubr.f32.gmra.mrb[0].mxu0 %v153
    %v1148 = vpop.f32.mrb[0].mxu0
    %v1149 = vadd.f32 0.0, %v1148
    %v1150 = vpop.f32.mrb[0].mxu0
    %1151 = vdwg.mxu0
    %v1152 = vadd.f32 %v1074, %v1149
    %v1153 = vmul.f32 %v1152, 0.5
    %v1154 = vtanh.pop %v1153
    %v1155 = vmul.f32 %v1154, 0.5
    %v1156 = vadd.f32 %v1155, 0.5
    %v1157 = vtanh.pop %v1152
    %v1158 = vmul.f32 %v1156, 0.0
    %1160 = vrot.lane.b32.xlu0 %v1157, 64
    %v1161 = vpop.permute.xlu0 %1160
    %v1163 = vmul.f32 %v1156, %v1161
    %1165 = vrot.lane.b32.xlu0 %v1163, 32
    %v1166 = vpop.permute.xlu0 %1165
    %v1168 = vadd.f32 %v1158, %v1166
    %v1169 = vtanh.pop %v1168
    %1171 = vrot.lane.b32.xlu0 %v1169, 64
    %v1172 = vpop.permute.xlu0 %1171
    %v1174 = vmul.f32 %v1156, %v1172
    %1176 = vrot.lane.b32.xlu0 %v1174, 32
    %v1177 = vpop.permute.xlu0 %1176
    %v1178 = vsel %vm151, %v1177, 0
    %1180 = vmatprep.subr.mxu0 0.0
    %1181 = vmatpush1.msra.mxu0 %v51
    %1182 = vmatprep.subr.mxu0 0.0
    %1183 = vmatpush1.msra.mxu0 %v52
    %1184 = vmatprep.subr.mxu0 0.0
    %1185 = vmatpush1.msra.mxu0 %v53
    %1186 = vmatprep.subr.mxu0 0.0
    %1187 = vmatpush1.msra.mxu0 %v54
    %1188 = vmatprep.subr.mxu0 0.0
    %1189 = vmatpush1.msra.mxu0 0.0
    %1190 = vmatprep.subr.mxu0 0.0
    %1191 = vmatpush1.msra.mxu0 0.0
    %1192 = vmatprep.subr.mxu0 0.0
    %1193 = vmatpush1.msra.mxu0 0.0
    %1194 = vmatprep.subr.mxu0 0.0
    %1195 = vmatpush1.msra.mxu0 0.0
    %1196 = vmatprep.subr.mxu0 0.0
    %1197 = vmatpush1.msra.mxu0 0.0
    %1198 = vmatprep.subr.mxu0 0.0
    %1199 = vmatpush1.msra.mxu0 0.0
    %1200 = vmatprep.subr.mxu0 0.0
    %1201 = vmatpush1.msra.mxu0 0.0
    %1202 = vmatprep.subr.mxu0 0.0
    %1203 = vmatpush1.msra.mxu0 0.0
    %1204 = vmatprep.subr.mxu0 0.0
    %1205 = vmatpush1.msra.mxu0 0.0
    %1206 = vmatprep.subr.mxu0 0.0
    %1207 = vmatpush1.msra.mxu0 0.0
    %1208 = vmatprep.subr.mxu0 0.0
    %1209 = vmatpush1.msra.mxu0 0.0
    %1210 = vmatprep.subr.mxu0 0.0
    %1211 = vmatpush1.msra.mxu0 0.0
    %1212 = vmatprep.subr.mxu0 0.0
    %1213 = vmatpush1.msra.mxu0 0.0
    %1214 = vmatprep.subr.mxu0 0.0
    %1215 = vmatpush1.msra.mxu0 0.0
    %1216 = vmatprep.subr.mxu0 0.0
    %1217 = vmatpush1.msra.mxu0 0.0
    %1218 = vmatprep.subr.mxu0 0.0
    %1219 = vmatpush1.msra.mxu0 0.0
    %1220 = vmatprep.subr.mxu0 0.0
    %1221 = vmatpush1.msra.mxu0 0.0
    %1222 = vmatprep.subr.mxu0 0.0
    %1223 = vmatpush1.msra.mxu0 0.0
    %1224 = vmatprep.subr.mxu0 0.0
    %1225 = vmatpush1.msra.mxu0 0.0
    %1226 = vmatprep.subr.mxu0 0.0
    %1227 = vmatpush1.msra.mxu0 0.0
    %1228 = vmatprep.subr.mxu0 0.0
    %1229 = vmatpush1.msra.mxu0 0.0
    %1230 = vmatprep.subr.mxu0 0.0
    %1231 = vmatpush1.msra.mxu0 0.0
    %1232 = vmatprep.subr.mxu0 0.0
    %1233 = vmatpush1.msra.mxu0 0.0
    %1234 = vmatprep.subr.mxu0 0.0
    %1235 = vmatpush1.msra.mxu0 0.0
    %1236 = vmatprep.subr.mxu0 0.0
    %1237 = vmatpush1.msra.mxu0 0.0
    %1238 = vmatprep.subr.mxu0 0.0
    %1239 = vmatpush1.msra.mxu0 0.0
    %1240 = vmatprep.subr.mxu0 0.0
    %1241 = vmatpush1.msra.mxu0 0.0
    %1242 = vmatprep.subr.mxu0 0.0
    %1243 = vmatpush1.msra.mxu0 0.0
    %1244 = vmatprep.mubr.f32.mxu0 0.0
    %1245 = vmatmul.mubr.f32.gmra.mrb[0].mxu0 %v1178
    %v1246 = vpop.f32.mrb[0].mxu0
    %v1247 = vadd.f32 0.0, %v1246
    %v1248 = vpop.f32.mrb[0].mxu0
    %1249 = vdwg.mxu0
    %v1251 = vrot.slane %v1247, 6
    %v1253 = vadd.f32 %v1074, %v1251
    %v1254 = vmul.f32 %v1253, 0.5
    %v1255 = vtanh.pop %v1254
    %v1256 = vmul.f32 %v1255, 0.5
    %v1257 = vadd.f32 %v1256, 0.5
    %v1258 = vtanh.pop %v1253
    %v1260 = vrot.slane %v1168, 6
    %v1262 = vmul.f32 %v1257, %v1260
    %1264 = vrot.lane.b32.xlu0 %v1258, 64
    %v1265 = vpop.permute.xlu0 %1264
    %v1267 = vmul.f32 %v1257, %v1265
    %1269 = vrot.lane.b32.xlu0 %v1267, 32
    %v1270 = vpop.permute.xlu0 %1269
    %v1272 = vadd.f32 %v1262, %v1270
    %v1273 = vtanh.pop %v1272
    %1275 = vrot.lane.b32.xlu0 %v1273, 64
    %v1276 = vpop.permute.xlu0 %1275
    %v1278 = vmul.f32 %v1257, %v1276
    %v1280 = vrot.slane %v1278, 2
    %1281 = vrot.lane.b32.xlu0 %v1280, 32
    %v1282 = vpop.permute.xlu0 %1281
    %v1283 = vsel %vm151, %v1282, 0
    %1285 = vmatprep.subr.mxu0 0.0
    %1286 = vmatpush1.msra.mxu0 %v51
    %1287 = vmatprep.subr.mxu0 0.0
    %1288 = vmatpush1.msra.mxu0 %v52
    %1289 = vmatprep.subr.mxu0 0.0
    %1290 = vmatpush1.msra.mxu0 %v53
    %1291 = vmatprep.subr.mxu0 0.0
    %1292 = vmatpush1.msra.mxu0 %v54
    %1293 = vmatprep.subr.mxu0 0.0
    %1294 = vmatpush1.msra.mxu0 0.0
    %1295 = vmatprep.subr.mxu0 0.0
    %1296 = vmatpush1.msra.mxu0 0.0
    %1297 = vmatprep.subr.mxu0 0.0
    %1298 = vmatpush1.msra.mxu0 0.0
    %1299 = vmatprep.subr.mxu0 0.0
    %1300 = vmatpush1.msra.mxu0 0.0
    %1301 = vmatprep.subr.mxu0 0.0
    %1302 = vmatpush1.msra.mxu0 0.0
    %1303 = vmatprep.subr.mxu0 0.0
    %1304 = vmatpush1.msra.mxu0 0.0
    %1305 = vmatprep.subr.mxu0 0.0
    %1306 = vmatpush1.msra.mxu0 0.0
    %1307 = vmatprep.subr.mxu0 0.0
    %1308 = vmatpush1.msra.mxu0 0.0
    %1309 = vmatprep.subr.mxu0 0.0
    %1310 = vmatpush1.msra.mxu0 0.0
    %1311 = vmatprep.subr.mxu0 0.0
    %1312 = vmatpush1.msra.mxu0 0.0
    %1313 = vmatprep.subr.mxu0 0.0
    %1314 = vmatpush1.msra.mxu0 0.0
    %1315 = vmatprep.subr.mxu0 0.0
    %1316 = vmatpush1.msra.mxu0 0.0
    %1317 = vmatprep.subr.mxu0 0.0
    %1318 = vmatpush1.msra.mxu0 0.0
    %1319 = vmatprep.subr.mxu0 0.0
    %1320 = vmatpush1.msra.mxu0 0.0
    %1321 = vmatprep.subr.mxu0 0.0
    %1322 = vmatpush1.msra.mxu0 0.0
    %1323 = vmatprep.subr.mxu0 0.0
    %1324 = vmatpush1.msra.mxu0 0.0
    %1325 = vmatprep.subr.mxu0 0.0
    %1326 = vmatpush1.msra.mxu0 0.0
    %1327 = vmatprep.subr.mxu0 0.0
    %1328 = vmatpush1.msra.mxu0 0.0
    %1329 = vmatprep.subr.mxu0 0.0
    %1330 = vmatpush1.msra.mxu0 0.0
    %1331 = vmatprep.subr.mxu0 0.0
    %1332 = vmatpush1.msra.mxu0 0.0
    %1333 = vmatprep.subr.mxu0 0.0
    %1334 = vmatpush1.msra.mxu0 0.0
    %1335 = vmatprep.subr.mxu0 0.0
    %1336 = vmatpush1.msra.mxu0 0.0
    %1337 = vmatprep.subr.mxu0 0.0
    %1338 = vmatpush1.msra.mxu0 0.0
    %1339 = vmatprep.subr.mxu0 0.0
    %1340 = vmatpush1.msra.mxu0 0.0
    %1341 = vmatprep.subr.mxu0 0.0
    %1342 = vmatpush1.msra.mxu0 0.0
    %1343 = vmatprep.subr.mxu0 0.0
    %1344 = vmatpush1.msra.mxu0 0.0
    %1345 = vmatprep.subr.mxu0 0.0
    %1346 = vmatpush1.msra.mxu0 0.0
    %1347 = vmatprep.subr.mxu0 0.0
    %1348 = vmatpush1.msra.mxu0 0.0
    %1349 = vmatprep.mubr.f32.mxu0 0.0
    %1350 = vmatmul.mubr.f32.gmra.mrb[0].mxu0 %v1283
    %v1351 = vpop.f32.mrb[0].mxu0
    %v1352 = vadd.f32 0.0, %v1351
    %v1353 = vpop.f32.mrb[0].mxu0
    %1354 = vdwg.mxu0
    %v1356 = vrot.slane %v1352, 4
    %v1358 = vadd.f32 %v1074, %v1356
    %v1359 = vmul.f32 %v1358, 0.5
    %v1360 = vtanh.pop %v1359
    %v1361 = vmul.f32 %v1360, 0.5
    %v1362 = vadd.f32 %v1361, 0.5
    %v1363 = vtanh.pop %v1358
    %v1365 = vrot.slane %v1272, 6
    %v1367 = vmul.f32 %v1362, %v1365
    %1369 = vrot.lane.b32.xlu0 %v1363, 64
    %v1370 = vpop.permute.xlu0 %1369
    %v1372 = vmul.f32 %v1362, %v1370
    %1374 = vrot.lane.b32.xlu0 %v1372, 32
    %v1375 = vpop.permute.xlu0 %1374
    %v1377 = vadd.f32 %v1367, %v1375
    %v1378 = vtanh.pop %v1377
    %1380 = vrot.lane.b32.xlu0 %v1378, 64
    %v1381 = vpop.permute.xlu0 %1380
    %v1383 = vmul.f32 %v1362, %v1381
    %v1385 = vrot.slane %v1383, 4
    %1386 = vrot.lane.b32.xlu0 %v1385, 32
    %v1387 = vpop.permute.xlu0 %1386
    %v1388 = vsel %vm151, %v1387, 0
    %1390 = vmatprep.subr.mxu0 0.0
    %1391 = vmatpush1.msra.mxu0 %v51
    %1392 = vmatprep.subr.mxu0 0.0
    %1393 = vmatpush1.msra.mxu0 %v52
    %1394 = vmatprep.subr.mxu0 0.0
    %1395 = vmatpush1.msra.mxu0 %v53
    %1396 = vmatprep.subr.mxu0 0.0
    %1397 = vmatpush1.msra.mxu0 %v54
    %1398 = vmatprep.subr.mxu0 0.0
    %1399 = vmatpush1.msra.mxu0 0.0
    %1400 = vmatprep.subr.mxu0 0.0
    %1401 = vmatpush1.msra.mxu0 0.0
    %1402 = vmatprep.subr.mxu0 0.0
    %1403 = vmatpush1.msra.mxu0 0.0
    %1404 = vmatprep.subr.mxu0 0.0
    %1405 = vmatpush1.msra.mxu0 0.0
    %1406 = vmatprep.subr.mxu0 0.0
    %1407 = vmatpush1.msra.mxu0 0.0
    %1408 = vmatprep.subr.mxu0 0.0
    %1409 = vmatpush1.msra.mxu0 0.0
    %1410 = vmatprep.subr.mxu0 0.0
    %1411 = vmatpush1.msra.mxu0 0.0
    %1412 = vmatprep.subr.mxu0 0.0
    %1413 = vmatpush1.msra.mxu0 0.0
    %1414 = vmatprep.subr.mxu0 0.0
    %1415 = vmatpush1.msra.mxu0 0.0
    %1416 = vmatprep.subr.mxu0 0.0
    %1417 = vmatpush1.msra.mxu0 0.0
    %1418 = vmatprep.subr.mxu0 0.0
    %1419 = vmatpush1.msra.mxu0 0.0
    %1420 = vmatprep.subr.mxu0 0.0
    %1421 = vmatpush1.msra.mxu0 0.0
    %1422 = vmatprep.subr.mxu0 0.0
    %1423 = vmatpush1.msra.mxu0 0.0
    %1424 = vmatprep.subr.mxu0 0.0
    %1425 = vmatpush1.msra.mxu0 0.0
    %1426 = vmatprep.subr.mxu0 0.0
    %1427 = vmatpush1.msra.mxu0 0.0
    %1428 = vmatprep.subr.mxu0 0.0
    %1429 = vmatpush1.msra.mxu0 0.0
    %1430 = vmatprep.subr.mxu0 0.0
    %1431 = vmatpush1.msra.mxu0 0.0
    %1432 = vmatprep.subr.mxu0 0.0
    %1433 = vmatpush1.msra.mxu0 0.0
    %1434 = vmatprep.subr.mxu0 0.0
    %1435 = vmatpush1.msra.mxu0 0.0
    %1436 = vmatprep.subr.mxu0 0.0
    %1437 = vmatpush1.msra.mxu0 0.0
    %1438 = vmatprep.subr.mxu0 0.0
    %1439 = vmatpush1.msra.mxu0 0.0
    %1440 = vmatprep.subr.mxu0 0.0
    %1441 = vmatpush1.msra.mxu0 0.0
    %1442 = vmatprep.subr.mxu0 0.0
    %1443 = vmatpush1.msra.mxu0 0.0
    %1444 = vmatprep.subr.mxu0 0.0
    %1445 = vmatpush1.msra.mxu0 0.0
    %1446 = vmatprep.subr.mxu0 0.0
    %1447 = vmatpush1.msra.mxu0 0.0
    %1448 = vmatprep.subr.mxu0 0.0
    %1449 = vmatpush1.msra.mxu0 0.0
    %1450 = vmatprep.subr.mxu0 0.0
    %1451 = vmatpush1.msra.mxu0 0.0
    %1452 = vmatprep.subr.mxu0 0.0
    %1453 = vmatpush1.msra.mxu0 0.0
    %1454 = vmatprep.mubr.f32.mxu0 0.0
    %1455 = vmatmul.mubr.f32.gmra.mrb[0].mxu0 %v1388
    %v1456 = vpop.f32.mrb[0].mxu0
    %v1457 = vadd.f32 0.0, %v1456
    %v1458 = vpop.f32.mrb[0].mxu0
    %1459 = vdwg.mxu0
    %v1461 = vrot.slane %v1457, 2
    %v1463 = vadd.f32 %v1074, %v1461
    %v1464 = vmul.f32 %v1463, 0.5
    %v1465 = vtanh.pop %v1464
    %v1466 = vmul.f32 %v1465, 0.5
    %v1467 = vadd.f32 %v1466, 0.5
    %v1468 = vtanh.pop %v1463
    %v1470 = vrot.slane %v1377, 6
    %v1472 = vmul.f32 %v1467, %v1470
    %1474 = vrot.lane.b32.xlu0 %v1468, 64
    %v1475 = vpop.permute.xlu0 %1474
    %v1477 = vmul.f32 %v1467, %v1475
    %1479 = vrot.lane.b32.xlu0 %v1477, 32
    %v1480 = vpop.permute.xlu0 %1479
    %v1482 = vadd.f32 %v1472, %v1480
    %v1483 = vtanh.pop %v1482
    %1485 = vrot.lane.b32.xlu0 %v1483, 64
    %v1486 = vpop.permute.xlu0 %1485
    %v1488 = vmul.f32 %v1467, %v1486
    %v1490 = vrot.slane %v1488, 6
    %1491 = vrot.lane.b32.xlu0 %v1490, 32
    %v1492 = vpop.permute.xlu0 %1491
    %v1493 = vsel %vm151, %v1492, 0
    %1495 = vmatprep.subr.mxu0 0.0
    %1496 = vmatpush1.msra.mxu0 %v51
    %1497 = vmatprep.subr.mxu0 0.0
    %1498 = vmatpush1.msra.mxu0 %v52
    %1499 = vmatprep.subr.mxu0 0.0
    %1500 = vmatpush1.msra.mxu0 %v53
    %1501 = vmatprep.subr.mxu0 0.0
    %1502 = vmatpush1.msra.mxu0 %v54
    %1503 = vmatprep.subr.mxu0 0.0
    %1504 = vmatpush1.msra.mxu0 0.0
    %1505 = vmatprep.subr.mxu0 0.0
    %1506 = vmatpush1.msra.mxu0 0.0
    %1507 = vmatprep.subr.mxu0 0.0
    %1508 = vmatpush1.msra.mxu0 0.0
    %1509 = vmatprep.subr.mxu0 0.0
    %1510 = vmatpush1.msra.mxu0 0.0
    %1511 = vmatprep.subr.mxu0 0.0
    %1512 = vmatpush1.msra.mxu0 0.0
    %1513 = vmatprep.subr.mxu0 0.0
    %1514 = vmatpush1.msra.mxu0 0.0
    %1515 = vmatprep.subr.mxu0 0.0
    %1516 = vmatpush1.msra.mxu0 0.0
    %1517 = vmatprep.subr.mxu0 0.0
    %1518 = vmatpush1.msra.mxu0 0.0
    %1519 = vmatprep.subr.mxu0 0.0
    %1520 = vmatpush1.msra.mxu0 0.0
    %1521 = vmatprep.subr.mxu0 0.0
    %1522 = vmatpush1.msra.mxu0 0.0
    %1523 = vmatprep.subr.mxu0 0.0
    %1524 = vmatpush1.msra.mxu0 0.0
    %1525 = vmatprep.subr.mxu0 0.0
    %1526 = vmatpush1.msra.mxu0 0.0
    %1527 = vmatprep.subr.mxu0 0.0
    %1528 = vmatpush1.msra.mxu0 0.0
    %1529 = vmatprep.subr.mxu0 0.0
    %1530 = vmatpush1.msra.mxu0 0.0
    %1531 = vmatprep.subr.mxu0 0.0
    %1532 = vmatpush1.msra.mxu0 0.0
    %1533 = vmatprep.subr.mxu0 0.0
    %1534 = vmatpush1.msra.mxu0 0.0
    %1535 = vmatprep.subr.mxu0 0.0
    %1536 = vmatpush1.msra.mxu0 0.0
    %1537 = vmatprep.subr.mxu0 0.0
    %1538 = vmatpush1.msra.mxu0 0.0
    %1539 = vmatprep.subr.mxu0 0.0
    %1540 = vmatpush1.msra.mxu0 0.0
    %1541 = vmatprep.subr.mxu0 0.0
    %1542 = vmatpush1.msra.mxu0 0.0
    %1543 = vmatprep.subr.mxu0 0.0
    %1544 = vmatpush1.msra.mxu0 0.0
    %1545 = vmatprep.subr.mxu0 0.0
    %1546 = vmatpush1.msra.mxu0 0.0
    %1547 = vmatprep.subr.mxu0 0.0
    %1548 = vmatpush1.msra.mxu0 0.0
    %1549 = vmatprep.subr.mxu0 0.0
    %1550 = vmatpush1.msra.mxu0 0.0
    %1551 = vmatprep.subr.mxu0 0.0
    %1552 = vmatpush1.msra.mxu0 0.0
    %1553 = vmatprep.subr.mxu0 0.0
    %1554 = vmatpush1.msra.mxu0 0.0
    %1555 = vmatprep.subr.mxu0 0.0
    %1556 = vmatpush1.msra.mxu0 0.0
    %1557 = vmatprep.subr.mxu0 0.0
    %1558 = vmatpush1.msra.mxu0 0.0
    %1559 = vmatprep.mubr.f32.mxu0 0.0
    %1560 = vmatmul.mubr.f32.gmra.mrb[0].mxu0 %v1493
    %v1561 = vpop.f32.mrb[0].mxu0
    %v1562 = vadd.f32 0.0, %v1561
    %v1563 = vpop.f32.mrb[0].mxu0
    %1564 = vdwg.mxu0
    %v1565 = vadd.f32 %v1079, %v1562
    %v1566 = vmul.f32 %v1565, 0.5
    %v1567 = vtanh.pop %v1566
    %v1568 = vmul.f32 %v1567, 0.5
    %v1569 = vadd.f32 %v1568, 0.5
    %v1570 = vtanh.pop %v1565
    %v1572 = vrot.slane %v1482, 6
    %v1574 = vmul.f32 %v1569, %v1572
    %1576 = vrot.lane.b32.xlu0 %v1570, 64
    %v1577 = vpop.permute.xlu0 %1576
    %v1579 = vmul.f32 %v1569, %v1577
    %1581 = vrot.lane.b32.xlu0 %v1579, 32
    %v1582 = vpop.permute.xlu0 %1581
    %v1584 = vadd.f32 %v1574, %v1582
    %v1585 = vtanh.pop %v1584
    %1587 = vrot.lane.b32.xlu0 %v1585, 64
    %v1588 = vpop.permute.xlu0 %1587
    %v1590 = vmul.f32 %v1569, %v1588
    %1592 = vrot.lane.b32.xlu0 %v1590, 32
    %v1593 = vpop.permute.xlu0 %1592
    %v1594 = vsel %vm151, %v1593, 0
    %1596 = vmatprep.subr.mxu0 0.0
    %1597 = vmatpush1.msra.mxu0 %v51
    %1598 = vmatprep.subr.mxu0 0.0
    %1599 = vmatpush1.msra.mxu0 %v52
    %1600 = vmatprep.subr.mxu0 0.0
    %1601 = vmatpush1.msra.mxu0 %v53
    %1602 = vmatprep.subr.mxu0 0.0
    %1603 = vmatpush1.msra.mxu0 %v54
    %1604 = vmatprep.subr.mxu0 0.0
    %1605 = vmatpush1.msra.mxu0 0.0
    %1606 = vmatprep.subr.mxu0 0.0
    %1607 = vmatpush1.msra.mxu0 0.0
    %1608 = vmatprep.subr.mxu0 0.0
    %1609 = vmatpush1.msra.mxu0 0.0
    %1610 = vmatprep.subr.mxu0 0.0
    %1611 = vmatpush1.msra.mxu0 0.0
    %1612 = vmatprep.subr.mxu0 0.0
    %1613 = vmatpush1.msra.mxu0 0.0
    %1614 = vmatprep.subr.mxu0 0.0
    %1615 = vmatpush1.msra.mxu0 0.0
    %1616 = vmatprep.subr.mxu0 0.0
    %1617 = vmatpush1.msra.mxu0 0.0
    %1618 = vmatprep.subr.mxu0 0.0
    %1619 = vmatpush1.msra.mxu0 0.0
    %1620 = vmatprep.subr.mxu0 0.0
    %1621 = vmatpush1.msra.mxu0 0.0
    %1622 = vmatprep.subr.mxu0 0.0
    %1623 = vmatpush1.msra.mxu0 0.0
    %1624 = vmatprep.subr.mxu0 0.0
    %1625 = vmatpush1.msra.mxu0 0.0
    %1626 = vmatprep.subr.mxu0 0.0
    %1627 = vmatpush1.msra.mxu0 0.0
    %1628 = vmatprep.subr.mxu0 0.0
    %1629 = vmatpush1.msra.mxu0 0.0
    %1630 = vmatprep.subr.mxu0 0.0
    %1631 = vmatpush1.msra.mxu0 0.0
    %1632 = vmatprep.subr.mxu0 0.0
    %1633 = vmatpush1.msra.mxu0 0.0
    %1634 = vmatprep.subr.mxu0 0.0
    %1635 = vmatpush1.msra.mxu0 0.0
    %1636 = vmatprep.subr.mxu0 0.0
    %1637 = vmatpush1.msra.mxu0 0.0
    %1638 = vmatprep.subr.mxu0 0.0
    %1639 = vmatpush1.msra.mxu0 0.0
    %1640 = vmatprep.subr.mxu0 0.0
    %1641 = vmatpush1.msra.mxu0 0.0
    %1642 = vmatprep.subr.mxu0 0.0
    %1643 = vmatpush1.msra.mxu0 0.0
    %1644 = vmatprep.subr.mxu0 0.0
    %1645 = vmatpush1.msra.mxu0 0.0
    %1646 = vmatprep.subr.mxu0 0.0
    %1647 = vmatpush1.msra.mxu0 0.0
    %1648 = vmatprep.subr.mxu0 0.0
    %1649 = vmatpush1.msra.mxu0 0.0
    %1650 = vmatprep.subr.mxu0 0.0
    %1651 = vmatpush1.msra.mxu0 0.0
    %1652 = vmatprep.subr.mxu0 0.0
    %1653 = vmatpush1.msra.mxu0 0.0
    %1654 = vmatprep.subr.mxu0 0.0
    %1655 = vmatpush1.msra.mxu0 0.0
    %1656 = vmatprep.subr.mxu0 0.0
    %1657 = vmatpush1.msra.mxu0 0.0
    %1658 = vmatprep.subr.mxu0 0.0
    %1659 = vmatpush1.msra.mxu0 0.0
    %1660 = vmatprep.mubr.f32.mxu0 0.0
    %1661 = vmatmul.mubr.f32.gmra.mrb[0].mxu0 %v1594
    %v1662 = vpop.f32.mrb[0].mxu0
    %v1663 = vadd.f32 0.0, %v1662
    %v1664 = vpop.f32.mrb[0].mxu0
    %1665 = vdwg.mxu0
    %v1667 = vrot.slane %v1663, 6
    %v1669 = vadd.f32 %v1079, %v1667
    %v1670 = vmul.f32 %v1669, 0.5
    %v1671 = vtanh.pop %v1670
    %v1672 = vmul.f32 %v1671, 0.5
    %v1673 = vadd.f32 %v1672, 0.5
    %v1674 = vtanh.pop %v1669
    %v1676 = vrot.slane %v1584, 6
    %v1678 = vmul.f32 %v1673, %v1676
    %1680 = vrot.lane.b32.xlu0 %v1674, 64
    %v1681 = vpop.permute.xlu0 %1680
    %v1683 = vmul.f32 %v1673, %v1681
    %1685 = vrot.lane.b32.xlu0 %v1683, 32
    %v1686 = vpop.permute.xlu0 %1685
    %v1688 = vadd.f32 %v1678, %v1686
    %v1689 = vtanh.pop %v1688
    %1691 = vrot.lane.b32.xlu0 %v1689, 64
    %v1692 = vpop.permute.xlu0 %1691
    %v1694 = vmul.f32 %v1673, %v1692
    %v1696 = vrot.slane %v1694, 2
    %1697 = vrot.lane.b32.xlu0 %v1696, 32
    %v1698 = vpop.permute.xlu0 %1697
    %v1699 = vsel %vm151, %v1698, 0
    %1701 = vmatprep.subr.mxu0 0.0
    %1702 = vmatpush1.msra.mxu0 %v51
    %1703 = vmatprep.subr.mxu0 0.0
    %1704 = vmatpush1.msra.mxu0 %v52
    %1705 = vmatprep.subr.mxu0 0.0
    %1706 = vmatpush1.msra.mxu0 %v53
    %1707 = vmatprep.subr.mxu0 0.0
    %1708 = vmatpush1.msra.mxu0 %v54
    %1709 = vmatprep.subr.mxu0 0.0
    %1710 = vmatpush1.msra.mxu0 0.0
    %1711 = vmatprep.subr.mxu0 0.0
    %1712 = vmatpush1.msra.mxu0 0.0
    %1713 = vmatprep.subr.mxu0 0.0
    %1714 = vmatpush1.msra.mxu0 0.0
    %1715 = vmatprep.subr.mxu0 0.0
    %1716 = vmatpush1.msra.mxu0 0.0
    %1717 = vmatprep.subr.mxu0 0.0
    %1718 = vmatpush1.msra.mxu0 0.0
    %1719 = vmatprep.subr.mxu0 0.0
    %1720 = vmatpush1.msra.mxu0 0.0
    %1721 = vmatprep.subr.mxu0 0.0
    %1722 = vmatpush1.msra.mxu0 0.0
    %1723 = vmatprep.subr.mxu0 0.0
    %1724 = vmatpush1.msra.mxu0 0.0
    %1725 = vmatprep.subr.mxu0 0.0
    %1726 = vmatpush1.msra.mxu0 0.0
    %1727 = vmatprep.subr.mxu0 0.0
    %1728 = vmatpush1.msra.mxu0 0.0
    %1729 = vmatprep.subr.mxu0 0.0
    %1730 = vmatpush1.msra.mxu0 0.0
    %1731 = vmatprep.subr.mxu0 0.0
    %1732 = vmatpush1.msra.mxu0 0.0
    %1733 = vmatprep.subr.mxu0 0.0
    %1734 = vmatpush1.msra.mxu0 0.0
    %1735 = vmatprep.subr.mxu0 0.0
    %1736 = vmatpush1.msra.mxu0 0.0
    %1737 = vmatprep.subr.mxu0 0.0
    %1738 = vmatpush1.msra.mxu0 0.0
    %1739 = vmatprep.subr.mxu0 0.0
    %1740 = vmatpush1.msra.mxu0 0.0
    %1741 = vmatprep.subr.mxu0 0.0
    %1742 = vmatpush1.msra.mxu0 0.0
    %1743 = vmatprep.subr.mxu0 0.0
    %1744 = vmatpush1.msra.mxu0 0.0
    %1745 = vmatprep.subr.mxu0 0.0
    %1746 = vmatpush1.msra.mxu0 0.0
    %1747 = vmatprep.subr.mxu0 0.0
    %1748 = vmatpush1.msra.mxu0 0.0
    %1749 = vmatprep.subr.mxu0 0.0
    %1750 = vmatpush1.msra.mxu0 0.0
    %1751 = vmatprep.subr.mxu0 0.0
    %1752 = vmatpush1.msra.mxu0 0.0
    %1753 = vmatprep.subr.mxu0 0.0
    %1754 = vmatpush1.msra.mxu0 0.0
    %1755 = vmatprep.subr.mxu0 0.0
    %1756 = vmatpush1.msra.mxu0 0.0
    %1757 = vmatprep.subr.mxu0 0.0
    %1758 = vmatpush1.msra.mxu0 0.0
    %1759 = vmatprep.subr.mxu0 0.0
    %1760 = vmatpush1.msra.mxu0 0.0
    %1761 = vmatprep.subr.mxu0 0.0
    %1762 = vmatpush1.msra.mxu0 0.0
    %1763 = vmatprep.subr.mxu0 0.0
    %1764 = vmatpush1.msra.mxu0 0.0
    %1765 = vmatprep.mubr.f32.mxu0 0.0
    %1766 = vmatmul.mubr.f32.gmra.mrb[0].mxu0 %v1699
    %v1767 = vpop.f32.mrb[0].mxu0
    %v1768 = vadd.f32 0.0, %v1767
    %v1769 = vpop.f32.mrb[0].mxu0
    %1770 = vdwg.mxu0
    %v1772 = vrot.slane %v1768, 4
    %v1774 = vadd.f32 %v1079, %v1772
    %v1775 = vmul.f32 %v1774, 0.5
    %v1776 = vtanh.pop %v1775
    %v1777 = vmul.f32 %v1776, 0.5
    %v1778 = vadd.f32 %v1777, 0.5
    %v1779 = vtanh.pop %v1774
    %v1781 = vrot.slane %v1688, 6
    %v1783 = vmul.f32 %v1778, %v1781
    %1785 = vrot.lane.b32.xlu0 %v1779, 64
    %v1786 = vpop.permute.xlu0 %1785
    %v1788 = vmul.f32 %v1778, %v1786
    %1790 = vrot.lane.b32.xlu0 %v1788, 32
    %v1791 = vpop.permute.xlu0 %1790
    %v1793 = vadd.f32 %v1783, %v1791
    %v1794 = vtanh.pop %v1793
    %1796 = vrot.lane.b32.xlu0 %v1794, 64
    %v1797 = vpop.permute.xlu0 %1796
    %v1799 = vmul.f32 %v1778, %v1797
    %v1801 = vrot.slane %v1799, 4
    %1802 = vrot.lane.b32.xlu0 %v1801, 32
    %v1803 = vpop.permute.xlu0 %1802
    %v1804 = vsel %vm151, %v1803, 0
    %1806 = vmatprep.subr.mxu0 0.0
    %1807 = vmatpush1.msra.mxu0 %v51
    %1808 = vmatprep.subr.mxu0 0.0
    %1809 = vmatpush1.msra.mxu0 %v52
    %1810 = vmatprep.subr.mxu0 0.0
    %1811 = vmatpush1.msra.mxu0 %v53
    %1812 = vmatprep.subr.mxu0 0.0
    %1813 = vmatpush1.msra.mxu0 %v54
    %1814 = vmatprep.subr.mxu0 0.0
    %1815 = vmatpush1.msra.mxu0 0.0
    %1816 = vmatprep.subr.mxu0 0.0
    %1817 = vmatpush1.msra.mxu0 0.0
    %1818 = vmatprep.subr.mxu0 0.0
    %1819 = vmatpush1.msra.mxu0 0.0
    %1820 = vmatprep.subr.mxu0 0.0
    %1821 = vmatpush1.msra.mxu0 0.0
    %1822 = vmatprep.subr.mxu0 0.0
    %1823 = vmatpush1.msra.mxu0 0.0
    %1824 = vmatprep.subr.mxu0 0.0
    %1825 = vmatpush1.msra.mxu0 0.0
    %1826 = vmatprep.subr.mxu0 0.0
    %1827 = vmatpush1.msra.mxu0 0.0
    %1828 = vmatprep.subr.mxu0 0.0
    %1829 = vmatpush1.msra.mxu0 0.0
    %1830 = vmatprep.subr.mxu0 0.0
    %1831 = vmatpush1.msra.mxu0 0.0
    %1832 = vmatprep.subr.mxu0 0.0
    %1833 = vmatpush1.msra.mxu0 0.0
    %1834 = vmatprep.subr.mxu0 0.0
    %1835 = vmatpush1.msra.mxu0 0.0
    %1836 = vmatprep.subr.mxu0 0.0
    %1837 = vmatpush1.msra.mxu0 0.0
    %1838 = vmatprep.subr.mxu0 0.0
    %1839 = vmatpush1.msra.mxu0 0.0
    %1840 = vmatprep.subr.mxu0 0.0
    %1841 = vmatpush1.msra.mxu0 0.0
    %1842 = vmatprep.subr.mxu0 0.0
    %1843 = vmatpush1.msra.mxu0 0.0
    %1844 = vmatprep.subr.mxu0 0.0
    %1845 = vmatpush1.msra.mxu0 0.0
    %1846 = vmatprep.subr.mxu0 0.0
    %1847 = vmatpush1.msra.mxu0 0.0
    %1848 = vmatprep.subr.mxu0 0.0
    %1849 = vmatpush1.msra.mxu0 0.0
    %1850 = vmatprep.subr.mxu0 0.0
    %1851 = vmatpush1.msra.mxu0 0.0
    %1852 = vmatprep.subr.mxu0 0.0
    %1853 = vmatpush1.msra.mxu0 0.0
    %1854 = vmatprep.subr.mxu0 0.0
    %1855 = vmatpush1.msra.mxu0 0.0
    %1856 = vmatprep.subr.mxu0 0.0
    %1857 = vmatpush1.msra.mxu0 0.0
    %1858 = vmatprep.subr.mxu0 0.0
    %1859 = vmatpush1.msra.mxu0 0.0
    %1860 = vmatprep.subr.mxu0 0.0
    %1861 = vmatpush1.msra.mxu0 0.0
    %1862 = vmatprep.subr.mxu0 0.0
    %1863 = vmatpush1.msra.mxu0 0.0
    %1864 = vmatprep.subr.mxu0 0.0
    %1865 = vmatpush1.msra.mxu0 0.0
    %1866 = vmatprep.subr.mxu0 0.0
    %1867 = vmatpush1.msra.mxu0 0.0
    %1868 = vmatprep.subr.mxu0 0.0
    %1869 = vmatpush1.msra.mxu0 0.0
    %1870 = vmatprep.mubr.f32.mxu0 0.0
    %1871 = vmatmul.mubr.f32.gmra.mrb[0].mxu0 %v1804
    %v1872 = vpop.f32.mrb[0].mxu0
    %v1873 = vadd.f32 0.0, %v1872
    %v1874 = vpop.f32.mrb[0].mxu0
    %1875 = vdwg.mxu0
    %v1877 = vrot.slane %v1873, 2
    %v1879 = vadd.f32 %v1079, %v1877
    %v1880 = vmul.f32 %v1879, 0.5
    %v1881 = vtanh.pop %v1880
    %v1882 = vmul.f32 %v1881, 0.5
    %v1883 = vadd.f32 %v1882, 0.5
    %v1884 = vtanh.pop %v1879
    %v1886 = vrot.slane %v1793, 6
    %v1888 = vmul.f32 %v1883, %v1886
    %1890 = vrot.lane.b32.xlu0 %v1884, 64
    %v1891 = vpop.permute.xlu0 %1890
    %v1893 = vmul.f32 %v1883, %v1891
    %1895 = vrot.lane.b32.xlu0 %v1893, 32
    %v1896 = vpop.permute.xlu0 %1895
    %v1898 = vadd.f32 %v1888, %v1896
    %v1899 = vtanh.pop %v1898
    %1901 = vrot.lane.b32.xlu0 %v1899, 64
    %v1902 = vpop.permute.xlu0 %1901
    %v1904 = vmul.f32 %v1883, %v1902
    %v1905 = vld [vmem:[%s7] sm:$0xff]
    %v1906 = vld [vmem:[%s7 + $0x8] sm:$0xff]
    %v1907 = vld [vmem:[%s7 + $0x10] sm:$0xff]
    %v1908 = vld [vmem:[%s7 + $0x18] sm:$0xff]
    %v1909 = vld [vmem:[%s8] sm:$0x1]
    %v1911 = vlaneseq
    %v1912 = vshrl.u32 %v1911, 7
    %v1913 = vsub.s32 0, %v1912
    %v1914 = vrot.slane %v1909, %v1913
    %v1917 = vrot.slane %v1904, 6
    %1918 = vrot.lane.b32.xlu0 %v1917, 32
    %v1919 = vpop.permute.xlu0 %1918
    %v1920 = vsel %vm151, %v1919, 0
    %1922 = vmatprep.subr.mxu0 0.0
    %1923 = vmatpush1.msra.mxu0 %v1905
    %1924 = vmatprep.subr.mxu0 0.0
    %1925 = vmatpush1.msra.mxu0 %v1906
    %1926 = vmatprep.subr.mxu0 0.0
    %1927 = vmatpush1.msra.mxu0 %v1907
    %1928 = vmatprep.subr.mxu0 0.0
    %1929 = vmatpush1.msra.mxu0 %v1908
    %1930 = vmatprep.subr.mxu0 0.0
    %1931 = vmatpush1.msra.mxu0 0.0
    %1932 = vmatprep.subr.mxu0 0.0
    %1933 = vmatpush1.msra.mxu0 0.0
    %1934 = vmatprep.subr.mxu0 0.0
    %1935 = vmatpush1.msra.mxu0 0.0
    %1936 = vmatprep.subr.mxu0 0.0
    %1937 = vmatpush1.msra.mxu0 0.0
    %1938 = vmatprep.subr.mxu0 0.0
    %1939 = vmatpush1.msra.mxu0 0.0
    %1940 = vmatprep.subr.mxu0 0.0
    %1941 = vmatpush1.msra.mxu0 0.0
    %1942 = vmatprep.subr.mxu0 0.0
    %1943 = vmatpush1.msra.mxu0 0.0
    %1944 = vmatprep.subr.mxu0 0.0
    %1945 = vmatpush1.msra.mxu0 0.0
    %1946 = vmatprep.subr.mxu0 0.0
    %1947 = vmatpush1.msra.mxu0 0.0
    %1948 = vmatprep.subr.mxu0 0.0
    %1949 = vmatpush1.msra.mxu0 0.0
    %1950 = vmatprep.subr.mxu0 0.0
    %1951 = vmatpush1.msra.mxu0 0.0
    %1952 = vmatprep.subr.mxu0 0.0
    %1953 = vmatpush1.msra.mxu0 0.0
    %1954 = vmatprep.subr.mxu0 0.0
    %1955 = vmatpush1.msra.mxu0 0.0
    %1956 = vmatprep.subr.mxu0 0.0
    %1957 = vmatpush1.msra.mxu0 0.0
    %1958 = vmatprep.subr.mxu0 0.0
    %1959 = vmatpush1.msra.mxu0 0.0
    %1960 = vmatprep.subr.mxu0 0.0
    %1961 = vmatpush1.msra.mxu0 0.0
    %1962 = vmatprep.subr.mxu0 0.0
    %1963 = vmatpush1.msra.mxu0 0.0
    %1964 = vmatprep.subr.mxu0 0.0
    %1965 = vmatpush1.msra.mxu0 0.0
    %1966 = vmatprep.subr.mxu0 0.0
    %1967 = vmatpush1.msra.mxu0 0.0
    %1968 = vmatprep.subr.mxu0 0.0
    %1969 = vmatpush1.msra.mxu0 0.0
    %1970 = vmatprep.subr.mxu0 0.0
    %1971 = vmatpush1.msra.mxu0 0.0
    %1972 = vmatprep.subr.mxu0 0.0
    %1973 = vmatpush1.msra.mxu0 0.0
    %1974 = vmatprep.subr.mxu0 0.0
    %1975 = vmatpush1.msra.mxu0 0.0
    %1976 = vmatprep.subr.mxu0 0.0
    %1977 = vmatpush1.msra.mxu0 0.0
    %1978 = vmatprep.subr.mxu0 0.0
    %1979 = vmatpush1.msra.mxu0 0.0
    %1980 = vmatprep.subr.mxu0 0.0
    %1981 = vmatpush1.msra.mxu0 0.0
    %1982 = vmatprep.subr.mxu0 0.0
    %1983 = vmatpush1.msra.mxu0 0.0
    %1984 = vmatprep.subr.mxu0 0.0
    %1985 = vmatpush1.msra.mxu0 0.0
    %1986 = vmatprep.mubr.f32.mxu0 0.0
    %1987 = vmatmul.mubr.f32.gmra.mrb[0].mxu0 %v1920
    %v1988 = vpop.f32.mrb[0].mxu0
    %v1989 = vadd.f32 %v1914, %v1988
    %v1990 = vpop.f32.mrb[0].mxu0
    %1991 = vdwg.mxu0
    %vm1992 = vcmask 25600
    %1993 = vst.msk [vmem:[#allocation5] sm:$0x3] %vm1992, %v1989
    // Predicated region
    $region42: #{jr_inv_lstm_forward.1} parent=1 // pred_check
      _
    $region43: #{jr_inv_lstm_forward.1} parent=1 // pred_check_branch
      %1995 = sbr.rel (0) target = $region45
    $region44: #{jr_inv_lstm_forward.1} parent=1 // pred_region
      %s1997 = ssub.s32 32, 32
      %1998 = vsyncadd [#allocation4], %s1997
      %s2000 = sshll.u32 [#allocation5], 4
      %s2001 = int_to_ptr.vmem [resolvable:$true] %s2000
      %2003 = dma.vmem_to_hbm [thread:$0]  %s2001, 32, %s9, [#allocation4]
    $region45: #{jr_inv_lstm_forward.1} parent=1 // pred_fallthru
      _
    // Predicated region
    $region46: #{jr_inv_lstm_forward.1} parent=1 // pred_check
      _
    $region47: #{jr_inv_lstm_forward.1} parent=1 // pred_check_branch
      %2005 = sbr.rel (0) target = $region49
    $region48: #{jr_inv_lstm_forward.1} parent=1 // pred_region
      %2006 = dma.done [#allocation4], 32
    $region49: #{jr_inv_lstm_forward.1} parent=1 // pred_fallthru
      _
    %2007 = vsyncpa [#allocation3], 1
    %2008 = vsyncpa [#allocation4], 1

</llo_original>
